<compile_context>
chip_gen: v7x
topology: tpu7x:2x2x1
jax: 0.10.0
libtpu: 0.0.40
codegen_flags: <defaults>
</compile_context>

<pallas_src>
import functools

import jax
import jax.numpy as jnp
from jax.experimental import pallas as pl
from jax.experimental.pallas import tpu as pltpu


def _round_up(x, m):
    return ((x + m - 1) // m) * m


def _ffn_kernel(x_ref, w1t_ref, b1_ref, w2t_ref, b2_ref, gamma_ref, beta_ref,
                o_ref, *, eps, inv_d_in, hid_chunks):
    x = x_ref[...]                                    # (tile_rows, d_in_p), native dtype
    x_f32 = x.astype(jnp.float32)

    # Residual + second-conv bias; hidden-chunk contributions accumulate on top.
    acc = x_f32 + b2_ref[...].astype(jnp.float32)

    # Statically unrolled loop over hidden chunks of the VMEM-resident weights.
    for start, size in hid_chunks:
        w1c = w1t_ref[:, pl.ds(start, size)]          # (d_in_p, size) view, static slice
        h = jnp.dot(x, w1c, preferred_element_type=jnp.float32)
        h = jnp.maximum(h + b1_ref[:, pl.ds(start, size)].astype(jnp.float32), 0.0)
        w2c = w2t_ref[pl.ds(start, size), :]          # (size, d_in_p)
        acc = acc + jnp.dot(h.astype(w2c.dtype), w2c,
                            preferred_element_type=jnp.float32)

    # dropout (inference) -> identity.  LayerNorm over the real d_in lanes: padded
    # lanes of acc are exactly zero, so the unmasked sums are exact.
    y = acc
    mean = jnp.sum(y, axis=-1, keepdims=True) * inv_d_in
    var = jnp.sum(y * y, axis=-1, keepdims=True) * inv_d_in - mean * mean
    var = jnp.maximum(var, 0.0)
    norm = (y - mean) * jax.lax.rsqrt(var + eps)
    out = norm * gamma_ref[...].astype(jnp.float32) + beta_ref[...].astype(jnp.float32)
    o_ref[...] = out.astype(o_ref.dtype)


def positionwise_ffn(x, w1, b1, w2, b2, gamma, beta, *, eps=1e-5,
                     tile_rows=512, hid_chunk=512,
                     vmem_budget_bytes=28 * 1024 * 1024):
    """x: (B, L, d_in). w1: (d_hid, d_in), b1: (d_hid,), w2: (d_in, d_hid),
    b2 / gamma / beta: (d_in,). Returns (B, L, d_in)."""
    B, L, d_in = x.shape
    d_hid = w1.shape[0]
    N = B * L
    itemsize = jnp.dtype(x.dtype).itemsize
    row_align = {4: 8, 2: 16, 1: 32}.get(itemsize, 8)

    # Lane-dense feature layout (no vst.msk partial stores on the output slab).
    d_in_p = _round_up(d_in, 128)
    d_hid_p = _round_up(d_hid, 128)
    tk = min(_round_up(hid_chunk, 128), d_hid_p)      # hidden chunk, multiple of 128

    # Row tiling: keep >= 2 row tiles when possible (v7x: 2 TensorCores), round to
    # the dtype's sublane packing.
    if N <= 2 * row_align:
        tr = _round_up(max(N, 1), row_align)
    else:
        tr = min(tile_rows, _round_up(pl.cdiv(N, 2), row_align))
    tr = max(row_align, _round_up(tr, row_align))

    def vmem_estimate(rows):
        weights = 2 * d_in_p * d_hid_p * itemsize          # resident W1^T + W2^T
        acts = 4 * rows * d_in_p * itemsize                # x + out, double-buffered
        acc = rows * d_in_p * 4                            # f32 accumulator
        h_tmp = 2 * rows * tk * 4                          # hidden-chunk temporaries
        vecs = (4 * d_in_p + d_hid_p) * 4                  # biases / gamma / beta
        return weights + acts + acc + h_tmp + vecs

    while tr > row_align and vmem_estimate(tr) > vmem_budget_bytes:
        tr = max(row_align, _round_up(tr // 2, row_align))

    # Feature padding only when d_in is not lane-aligned (zero K lanes must be
    # explicit for matmul safety).  Rows use a cdiv grid + masked remainder block,
    # so no row pad and no row slice.
    if d_in_p != d_in:
        x2d = jnp.pad(x.reshape(N, d_in), ((0, 0), (0, d_in_p - d_in)))
    else:
        x2d = x.reshape(N, d_in)

    # Pre-transpose / pad the (small) weights in glue code.
    w1t = jnp.pad(w1.T, ((0, d_in_p - d_in), (0, d_hid_p - d_hid)))     # (d_in_p, d_hid_p)
    w2t = jnp.pad(w2.T, ((0, d_hid_p - d_hid), (0, d_in_p - d_in)))     # (d_hid_p, d_in_p)
    b1p = jnp.pad(b1, (0, d_hid_p - d_hid)).reshape(1, d_hid_p)
    b2p = jnp.pad(b2, (0, d_in_p - d_in)).reshape(1, d_in_p)
    gammap = jnp.pad(gamma, (0, d_in_p - d_in)).reshape(1, d_in_p)
    betap = jnp.pad(beta, (0, d_in_p - d_in)).reshape(1, d_in_p)

    # Static hidden-chunk schedule (all chunk sizes are multiples of 128; the last
    # chunk shrinks instead of over-padding d_hid).
    hid_chunks = []
    start = 0
    while start < d_hid_p:
        size = min(tk, d_hid_p - start)
        hid_chunks.append((start, size))
        start += size
    hid_chunks = tuple(hid_chunks)

    grid = (pl.cdiv(N, tr),)

    est = vmem_estimate(tr)
    vmem_limit = int(min(max(int(1.25 * est) + (4 << 20), 32 << 20), 48 << 20))

    cost = pl.CostEstimate(
        flops=4 * N * d_hid_p * d_in_p,
        transcendentals=N,
        bytes_accessed=2 * N * d_in_p * itemsize + 2 * d_in_p * d_hid_p * itemsize)

    out2d = pl.pallas_call(
        functools.partial(_ffn_kernel, eps=eps, inv_d_in=float(1.0 / d_in),
                          hid_chunks=hid_chunks),
        out_shape=jax.ShapeDtypeStruct((N, d_in_p), x.dtype),
        grid_spec=pltpu.PrefetchScalarGridSpec(
            num_scalar_prefetch=0,
            grid=grid,
            in_specs=[
                pl.BlockSpec((tr, d_in_p),      lambda i: (i, 0)),   # x row tile
                pl.BlockSpec((d_in_p, d_hid_p), lambda i: (0, 0)),   # W1^T  (VMEM-resident)
                pl.BlockSpec((1, d_hid_p),      lambda i: (0, 0)),   # b1    (resident)
                pl.BlockSpec((d_hid_p, d_in_p), lambda i: (0, 0)),   # W2^T  (resident)
                pl.BlockSpec((1, d_in_p),       lambda i: (0, 0)),   # b2
                pl.BlockSpec((1, d_in_p),       lambda i: (0, 0)),   # gamma
                pl.BlockSpec((1, d_in_p),       lambda i: (0, 0)),   # beta
            ],
            out_specs=pl.BlockSpec((tr, d_in_p), lambda i: (i, 0)),
        ),
        compiler_params=pltpu.CompilerParams(
            dimension_semantics=("parallel",),
            vmem_limit_bytes=vmem_limit),
        cost_estimate=cost,
    )(x2d, w1t, b1p, w2t, b2p, gammap, betap)

    if d_in_p != d_in:
        out2d = out2d[:, :d_in]
    return out2d.reshape(B, L, d_in)


def _reference(x, w1, b1, w2, b2, gamma, beta, eps=1e-5):
    xf = x.astype(jnp.float32)
    h = jnp.maximum(jnp.einsum("bld,hd->blh", xf, w1.astype(jnp.float32)) + b1, 0.0)
    y = jnp.einsum("blh,dh->bld", h, w2.astype(jnp.float32)) + b2
    y = y + xf
    mean = jnp.mean(y, axis=-1, keepdims=True)
    var = jnp.mean((y - mean) ** 2, axis=-1, keepdims=True)
    return ((y - mean) / jnp.sqrt(var + eps)) * gamma + beta


if __name__ == "__main__":
    key = jax.random.PRNGKey(0)

    def make_params(k, d_in, d_hid):
        k1, kb1, k2, kb2 = jax.random.split(k, 4)
        w1 = 0.1 * jax.random.normal(k1, (d_hid, d_in), dtype=jnp.float32)
        b1 = 0.1 * jax.random.normal(kb1, (d_hid,), dtype=jnp.float32)
        w2 = 0.1 * jax.random.normal(k2, (d_in, d_hid), dtype=jnp.float32)
        b2 = 0.1 * jax.random.normal(kb2, (d_in,), dtype=jnp.float32)
        gamma = jnp.ones((d_in,), dtype=jnp.float32)   # LayerNorm weight init
        beta = jnp.zeros((d_in,), dtype=jnp.float32)   # LayerNorm bias init
        return w1, b1, w2, b2, gamma, beta

    # Case 1: small d_in (32) exercises the feature-padding path; B*L = 512 rows
    # gives two full 256-row tiles (>= 2 tiles for v7x megacore).
    B, L, d_in, d_hid = 4, 128, 32, 64
    kx, kp, key = jax.random.split(key, 3)
    x = jax.random.normal(kx, (B, L, d_in), dtype=jnp.float32)
    params = make_params(kp, d_in, d_hid)
    out = jax.block_until_ready(positionwise_ffn(x, *params))
    ref = _reference(x, *params)
    assert out.shape == (B, L, d_in)
    assert jnp.allclose(out, ref, atol=1e-4, rtol=1e-4), "case 1 mismatch vs reference"

    # Case 2: lane-aligned d_in (no pad, no output slice) and a non-divisible row
    # count exercising the masked remainder row block.
    B, L, d_in, d_hid = 2, 37, 128, 256
    kx, kp, key = jax.random.split(key, 3)
    x = jax.random.normal(kx, (B, L, d_in), dtype=jnp.float32)
    params = make_params(kp, d_in, d_hid)
    out = jax.block_until_ready(positionwise_ffn(x, *params))
    ref = _reference(x, *params)
    assert out.shape == (B, L, d_in)
    assert jnp.allclose(out, ref, atol=1e-4, rtol=1e-4), "case 2 mismatch vs reference"

    print("KERNEL_OK")
</pallas_src>

<mosaic_0001>
module attributes {stable_mosaic.version = 11 : i64} {
  func.func @_ffn_kernel(%arg0: i32, %arg1: memref<256x128xf32, #tpu.memory_space<vmem>>, %arg2: memref<128x128xf32, #tpu.memory_space<vmem>>, %arg3: memref<1x128xf32, #tpu.memory_space<vmem>>, %arg4: memref<128x128xf32, #tpu.memory_space<vmem>>, %arg5: memref<1x128xf32, #tpu.memory_space<vmem>>, %arg6: memref<1x128xf32, #tpu.memory_space<vmem>>, %arg7: memref<1x128xf32, #tpu.memory_space<vmem>>, %arg8: memref<256x128xf32, #tpu.memory_space<vmem>>) attributes {dimension_semantics = [#tpu.dimension_semantics<parallel>], iteration_bounds = array<i64: 2>, scalar_prefetch = 0 : i64, scratch_operands = 0 : i64, tpu.core_type = #tpu.core_type<tc>, window_params = [{transform_indices = @transform_0, window_bounds = array<i64: 256, 128>}, {pipeline_mode = #tpu.pipeline_mode<synchronous>, transform_indices = @transform_1, window_bounds = array<i64: 128, 128>}, {pipeline_mode = #tpu.pipeline_mode<synchronous>, transform_indices = @transform_2, window_bounds = array<i64: 1, 128>}, {pipeline_mode = #tpu.pipeline_mode<synchronous>, transform_indices = @transform_3, window_bounds = array<i64: 128, 128>}, {pipeline_mode = #tpu.pipeline_mode<synchronous>, transform_indices = @transform_4, window_bounds = array<i64: 1, 128>}, {pipeline_mode = #tpu.pipeline_mode<synchronous>, transform_indices = @transform_5, window_bounds = array<i64: 1, 128>}, {pipeline_mode = #tpu.pipeline_mode<synchronous>, transform_indices = @transform_6, window_bounds = array<i64: 1, 128>}, {transform_indices = @transform_7, window_bounds = array<i64: 256, 128>}]} {
    %c0 = arith.constant 0 : index
    %c0_0 = arith.constant 0 : index
    %0 = vector.load %arg1[%c0, %c0_0] : memref<256x128xf32, #tpu.memory_space<vmem>>, vector<256x128xf32>
    %c0_1 = arith.constant 0 : index
    %c0_2 = arith.constant 0 : index
    %1 = vector.load %arg5[%c0_1, %c0_2] : memref<1x128xf32, #tpu.memory_space<vmem>>, vector<1x128xf32>
    %2 = vector.broadcast %1 : vector<1x128xf32> to vector<256x128xf32>
    %3 = arith.addf %0, %2 : vector<256x128xf32>
    %c0_3 = arith.constant 0 : index
    %c0_4 = arith.constant 0 : index
    %4 = vector.load %arg2[%c0_3, %c0_4] : memref<128x128xf32, #tpu.memory_space<vmem>>, vector<128x128xf32>
    %cst = arith.constant dense<0.000000e+00> : vector<256x128xf32>
    %5 = tpu.matmul %0, %4, %cst {dimension_numbers = #tpu.dot_dimension_numbers<[1], [0], [0], [1], [0, 0, 1, 1], [], []>} : vector<256x128xf32>, vector<128x128xf32>, vector<256x128xf32> -> vector<256x128xf32>
    %c0_5 = arith.constant 0 : index
    %c0_6 = arith.constant 0 : index
    %6 = vector.load %arg3[%c0_5, %c0_6] : memref<1x128xf32, #tpu.memory_space<vmem>>, vector<1x128xf32>
    %7 = vector.broadcast %6 : vector<1x128xf32> to vector<256x128xf32>
    %8 = arith.addf %5, %7 : vector<256x128xf32>
    %cst_7 = arith.constant 0.000000e+00 : f32
    %9 = vector.broadcast %cst_7 : f32 to vector<256x128xf32>
    %10 = arith.maximumf %8, %9 : vector<256x128xf32>
    %c0_8 = arith.constant 0 : index
    %c0_9 = arith.constant 0 : index
    %11 = vector.load %arg4[%c0_8, %c0_9] : memref<128x128xf32, #tpu.memory_space<vmem>>, vector<128x128xf32>
    %cst_10 = arith.constant dense<0.000000e+00> : vector<256x128xf32>
    %12 = tpu.matmul %10, %11, %cst_10 {dimension_numbers = #tpu.dot_dimension_numbers<[1], [0], [0], [1], [0, 0, 1, 1], [], []>} : vector<256x128xf32>, vector<128x128xf32>, vector<256x128xf32> -> vector<256x128xf32>
    %13 = arith.addf %3, %12 : vector<256x128xf32>
    %cst_11 = arith.constant dense<0.000000e+00> : vector<256xf32>
    %14 = vector.multi_reduction <add>, %13, %cst_11 [1] : vector<256x128xf32> to vector<256xf32>
    %15 = vector.shape_cast %14 : vector<256xf32> to vector<256x1xf32>
    %cst_12 = arith.constant 3.125000e-02 : f32
    %16 = vector.broadcast %cst_12 : f32 to vector<256x1xf32>
    %17 = arith.mulf %15, %16 : vector<256x1xf32>
    %18 = arith.mulf %13, %13 : vector<256x128xf32>
    %cst_13 = arith.constant dense<0.000000e+00> : vector<256xf32>
    %19 = vector.multi_reduction <add>, %18, %cst_13 [1] : vector<256x128xf32> to vector<256xf32>
    %20 = vector.shape_cast %19 : vector<256xf32> to vector<256x1xf32>
    %cst_14 = arith.constant 3.125000e-02 : f32
    %21 = vector.broadcast %cst_14 : f32 to vector<256x1xf32>
    %22 = arith.mulf %20, %21 : vector<256x1xf32>
    %23 = arith.mulf %17, %17 : vector<256x1xf32>
    %24 = arith.subf %22, %23 : vector<256x1xf32>
    %cst_15 = arith.constant 0.000000e+00 : f32
    %25 = vector.broadcast %cst_15 : f32 to vector<256x1xf32>
    %26 = arith.maximumf %24, %25 : vector<256x1xf32>
    %27 = vector.broadcast %17 : vector<256x1xf32> to vector<256x128xf32>
    %28 = arith.subf %13, %27 : vector<256x128xf32>
    %cst_16 = arith.constant 9.99999974E-6 : f32
    %29 = vector.broadcast %cst_16 : f32 to vector<256x1xf32>
    %30 = arith.addf %26, %29 : vector<256x1xf32>
    %31 = math.rsqrt %30 : vector<256x1xf32>
    %32 = vector.broadcast %31 : vector<256x1xf32> to vector<256x128xf32>
    %33 = arith.mulf %28, %32 : vector<256x128xf32>
    %c0_17 = arith.constant 0 : index
    %c0_18 = arith.constant 0 : index
    %34 = vector.load %arg6[%c0_17, %c0_18] : memref<1x128xf32, #tpu.memory_space<vmem>>, vector<1x128xf32>
    %35 = vector.broadcast %34 : vector<1x128xf32> to vector<256x128xf32>
    %36 = arith.mulf %33, %35 : vector<256x128xf32>
    %c0_19 = arith.constant 0 : index
    %c0_20 = arith.constant 0 : index
    %37 = vector.load %arg7[%c0_19, %c0_20] : memref<1x128xf32, #tpu.memory_space<vmem>>, vector<1x128xf32>
    %38 = vector.broadcast %37 : vector<1x128xf32> to vector<256x128xf32>
    %39 = arith.addf %36, %38 : vector<256x128xf32>
    %c0_21 = arith.constant 0 : index
    %c0_22 = arith.constant 0 : index
    %40 = vector.load %arg8[%c0_21, %c0_22] : memref<256x128xf32, #tpu.memory_space<vmem>>, vector<256x128xf32>
    tpu.vector_store %arg8[%c0_21, %c0_22], %39 {strides = array<i32>} : memref<256x128xf32, #tpu.memory_space<vmem>>, vector<256x128xf32>,
    return
  }
  func.func @transform_0(%arg0: i32) -> (i32, i32) {
    %c0_i32 = arith.constant 0 : i32
    %c0_i32_0 = arith.constant 0 : i32
    return %arg0, %c0_i32 : i32, i32
  }
  func.func @transform_1(%arg0: i32) -> (i32, i32) {
    %c0_i32 = arith.constant 0 : i32
    %c0_i32_0 = arith.constant 0 : i32
    %c0_i32_1 = arith.constant 0 : i32
    return %c0_i32, %c0_i32_0 : i32, i32
  }
  func.func @transform_2(%arg0: i32) -> (i32, i32) {
    %c0_i32 = arith.constant 0 : i32
    %c0_i32_0 = arith.constant 0 : i32
    %c0_i32_1 = arith.constant 0 : i32
    return %c0_i32, %c0_i32_0 : i32, i32
  }
  func.func @transform_3(%arg0: i32) -> (i32, i32) {
    %c0_i32 = arith.constant 0 : i32
    %c0_i32_0 = arith.constant 0 : i32
    %c0_i32_1 = arith.constant 0 : i32
    return %c0_i32, %c0_i32_0 : i32, i32
  }
  func.func @transform_4(%arg0: i32) -> (i32, i32) {
    %c0_i32 = arith.constant 0 : i32
    %c0_i32_0 = arith.constant 0 : i32
    %c0_i32_1 = arith.constant 0 : i32
    return %c0_i32, %c0_i32_0 : i32, i32
  }
  func.func @transform_5(%arg0: i32) -> (i32, i32) {
    %c0_i32 = arith.constant 0 : i32
    %c0_i32_0 = arith.constant 0 : i32
    %c0_i32_1 = arith.constant 0 : i32
    return %c0_i32, %c0_i32_0 : i32, i32
  }
  func.func @transform_6(%arg0: i32) -> (i32, i32) {
    %c0_i32 = arith.constant 0 : i32
    %c0_i32_0 = arith.constant 0 : i32
    %c0_i32_1 = arith.constant 0 : i32
    return %c0_i32, %c0_i32_0 : i32, i32
  }
  func.func @transform_7(%arg0: i32) -> (i32, i32) {
    %c0_i32 = arith.constant 0 : i32
    %c0_i32_0 = arith.constant 0 : i32
    return %arg0, %c0_i32 : i32, i32
  }
}

</mosaic_0001>

<llo_original>
// kernel: tpu_custom_call.1
$region0: #{tpu_custom_call.1}
  #allocation0 [shape = 'u32[]', space=smem, size = 0x4, offset = 0x4, fixed_abs, tag = 'smem constant byte address 0x4 - core index']
  #allocation1 [shape = 'u32[144,128]{1,0:T(1,128)}', space=vmem, size = 0x12000, scoped, tag = 'internal scratch']
  %s0 = inlined_call_operand.hbm [shape: f32[512,128], index: 0, kind: input, shape index: {}]
  %s1 = inlined_call_operand.hbm [shape: f32[128,128], index: 1, kind: input, shape index: {}]
  %s2 = inlined_call_operand.vmem [shape: f32[1,128], index: 2, kind: input, shape index: {}]
  %s3 = inlined_call_operand.hbm [shape: f32[128,128], index: 3, kind: input, shape index: {}]
  %s4 = inlined_call_operand.vmem [shape: f32[1,128], index: 4, kind: input, shape index: {}]
  %s5 = inlined_call_operand.vmem [shape: f32[1,128], index: 5, kind: input, shape index: {}]
  %s6 = inlined_call_operand.vmem [shape: f32[1,128], index: 6, kind: input, shape index: {}]
  %s7 = inlined_call_operand.hbm [shape: f32[512,128], index: 7, kind: output, shape index: {}]
  %s8 = sld [smem:[#allocation0]]
  $region73: #{tpu_custom_call.1} parent=0
    _
  %s10 = ssub.s32 1, %s8
  %s11 = scalar_select 0, %s10, %s8
  $region1: #{tpu_custom_call.1} parent=0
    #allocation2 [shape = 'u8[262144]{0}', space=vmem, size = 0x40000, scoped, tag = 'input window, operand 0']
    #allocation3 [shape = 's32[2]{0}', space=sflag, size = 0x8, scoped, tag = 'scoped memory for tpu_custom_call.1']
    #allocation4 [shape = 's32[2]{0}', space=sflag, size = 0x8, scoped, tag = 'scoped memory for tpu_custom_call.1']
    #allocation5 [shape = 'u8[65536]{0}', space=vmem, size = 0x10000, scoped, tag = 'input window, operand 1, single buffered']
    #allocation6 [shape = 's32[1]{0}', space=sflag, size = 0x4, scoped, tag = 'scoped memory for tpu_custom_call.1']
    #allocation7 [shape = 'u8[65536]{0}', space=vmem, size = 0x10000, scoped, tag = 'input window, operand 3, single buffered']
    #allocation8 [shape = 'u8[262144]{0}', space=vmem, size = 0x40000, scoped, tag = 'output window, operand 0']
    %12 = vsyncpa [#allocation3], 0
    %s13 = scalar_lea.sflag [#allocation3], 1
    %14 = vsyncpa %s13, 0
    %15 = vsyncpa [#allocation6], 0
    %16 = vsyncpa [#allocation4], 0
    %s17 = scalar_lea.sflag [#allocation4], 1
    %18 = vsyncpa %s17, 0
    loop: start=0, step=1, limit=4
    $region2: #{tpu_custom_call.1} parent=1 // loop_pre_header
      _
    $region3: #{tpu_custom_call.1} parent=1 // loop_header
      %s20 = sphi 0, %s24
      %p21 = scmp.ge.s32.totalorder %s20, 4
      %s30 = sphi 0, %s32
      %s33 = sphi 0, %s30
      %s34 = sphi 0, %s33
      %s50 = sphi 0, %s34
      %s54 = sphi 0, %s54
      %s56 = sphi 0, %s54
      %s57 = sphi 0, %s56
      %s71 = sphi 0, %s57
      %s75 = sphi 0, %s75
      %s77 = sphi 0, %s75
      %s78 = sphi 0, %s77
      %s92 = sphi 0, %s78
      %s96 = sphi 0, %s96
      %s98 = sphi 0, %s96
      %s99 = sphi 0, %s98
      %s113 = sphi 0, %s99
      %s117 = sphi 0, %s117
      %s119 = sphi 0, %s117
      %s120 = sphi 0, %s119
      %s134 = sphi 0, %s120
      %s138 = sphi 0, %s138
      %s140 = sphi 0, %s138
      %s141 = sphi 0, %s140
      %s155 = sphi 0, %s141
      %s159 = sphi 0, %s159
      %s161 = sphi 0, %s159
      %s162 = sphi 0, %s161
      %s176 = sphi 0, %s162
      %s182 = sphi 0, %s184
      %s185 = sphi 0, %s182
      %s186 = sphi 0, %s185
      %s202 = sphi 0, %s186
    $region4: #{tpu_custom_call.1} parent=1 // loop_header_branch
      %23 = sbr.rel (%p21) target = $region8
    $region5: #{tpu_custom_call.1} parent=1 // loop_body
      %s25 = ssub.s32 %s20, 1
      %s26 = ssub.s32 %s20, 2
      %s27 = sadd.s32 %s20, 1
      %s28 = ssub.s32 %s20, %s27
      %p29 = scmp.eq.s32.totalorder %s28, 0
      %s31 = sadd.s32 %s30, 1
      %s32 = scalar_select %p29, %s30, %s31
      %p35 = pneg %p29
      %p36 = scmp.eq.s32.totalorder %s20, 1
      %p37 = por %p35, %p36
      %p38 = scmp.ne.s32.totalorder %s30, %s33
      %p39 = scmp.eq.s32.totalorder %s20, 0
      %p40 = por %p38, %p39
      %p41 = scmp.ne.s32.totalorder %s30, %s33
      %p42 = scmp.eq.s32.totalorder %s25, 1
      %p43 = por %p41, %p42
      %p44 = scmp.ne.s32.totalorder %s33, %s34
      %p45 = scmp.eq.s32.totalorder %s25, 0
      %p46 = por %p44, %p45
      %p47 = scmp.ne.s32.totalorder %s33, %s34
      %p48 = scmp.eq.s32.totalorder %s26, 1
      %p49 = por %p47, %p48
      %p51 = scmp.ne.s32.totalorder %s34, %s50
      %p52 = scmp.eq.s32.totalorder %s26, 0
      %p53 = por %p51, %p52
      %s55 = sadd.s32 %s54, 1
      %p58 = scmp.eq.s32.totalorder %s20, 1
      %p59 = scmp.ne.s32.totalorder %s54, %s56
      %p60 = scmp.eq.s32.totalorder %s20, 0
      %p61 = por %p59, %p60
      %p62 = scmp.ne.s32.totalorder %s54, %s56
      %p63 = scmp.eq.s32.totalorder %s25, 1
      %p64 = por %p62, %p63
      %p65 = scmp.ne.s32.totalorder %s56, %s57
      %p66 = scmp.eq.s32.totalorder %s25, 0
      %p67 = por %p65, %p66
      %p68 = scmp.ne.s32.totalorder %s56, %s57
      %p69 = scmp.eq.s32.totalorder %s26, 1
      %p70 = por %p68, %p69
      %p72 = scmp.ne.s32.totalorder %s57, %s71
      %p73 = scmp.eq.s32.totalorder %s26, 0
      %p74 = por %p72, %p73
      %s76 = sadd.s32 %s75, 1
      %p79 = scmp.eq.s32.totalorder %s20, 1
      %p80 = scmp.ne.s32.totalorder %s75, %s77
      %p81 = scmp.eq.s32.totalorder %s20, 0
      %p82 = por %p80, %p81
      %p83 = scmp.ne.s32.totalorder %s75, %s77
      %p84 = scmp.eq.s32.totalorder %s25, 1
      %p85 = por %p83, %p84
      %p86 = scmp.ne.s32.totalorder %s77, %s78
      %p87 = scmp.eq.s32.totalorder %s25, 0
      %p88 = por %p86, %p87
      %p89 = scmp.ne.s32.totalorder %s77, %s78
      %p90 = scmp.eq.s32.totalorder %s26, 1
      %p91 = por %p89, %p90
      %p93 = scmp.ne.s32.totalorder %s78, %s92
      %p94 = scmp.eq.s32.totalorder %s26, 0
      %p95 = por %p93, %p94
      %s97 = sadd.s32 %s96, 1
      %p100 = scmp.eq.s32.totalorder %s20, 1
      %p101 = scmp.ne.s32.totalorder %s96, %s98
      %p102 = scmp.eq.s32.totalorder %s20, 0
      %p103 = por %p101, %p102
      %p104 = scmp.ne.s32.totalorder %s96, %s98
      %p105 = scmp.eq.s32.totalorder %s25, 1
      %p106 = por %p104, %p105
      %p107 = scmp.ne.s32.totalorder %s98, %s99
      %p108 = scmp.eq.s32.totalorder %s25, 0
      %p109 = por %p107, %p108
      %p110 = scmp.ne.s32.totalorder %s98, %s99
      %p111 = scmp.eq.s32.totalorder %s26, 1
      %p112 = por %p110, %p111
      %p114 = scmp.ne.s32.totalorder %s99, %s113
      %p115 = scmp.eq.s32.totalorder %s26, 0
      %p116 = por %p114, %p115
      %s118 = sadd.s32 %s117, 1
      %p121 = scmp.eq.s32.totalorder %s20, 1
      %p122 = scmp.ne.s32.totalorder %s117, %s119
      %p123 = scmp.eq.s32.totalorder %s20, 0
      %p124 = por %p122, %p123
      %p125 = scmp.ne.s32.totalorder %s117, %s119
      %p126 = scmp.eq.s32.totalorder %s25, 1
      %p127 = por %p125, %p126
      %p128 = scmp.ne.s32.totalorder %s119, %s120
      %p129 = scmp.eq.s32.totalorder %s25, 0
      %p130 = por %p128, %p129
      %p131 = scmp.ne.s32.totalorder %s119, %s120
      %p132 = scmp.eq.s32.totalorder %s26, 1
      %p133 = por %p131, %p132
      %p135 = scmp.ne.s32.totalorder %s120, %s134
      %p136 = scmp.eq.s32.totalorder %s26, 0
      %p137 = por %p135, %p136
      %s139 = sadd.s32 %s138, 1
      %p142 = scmp.eq.s32.totalorder %s20, 1
      %p143 = scmp.ne.s32.totalorder %s138, %s140
      %p144 = scmp.eq.s32.totalorder %s20, 0
      %p145 = por %p143, %p144
      %p146 = scmp.ne.s32.totalorder %s138, %s140
      %p147 = scmp.eq.s32.totalorder %s25, 1
      %p148 = por %p146, %p147
      %p149 = scmp.ne.s32.totalorder %s140, %s141
      %p150 = scmp.eq.s32.totalorder %s25, 0
      %p151 = por %p149, %p150
      %p152 = scmp.ne.s32.totalorder %s140, %s141
      %p153 = scmp.eq.s32.totalorder %s26, 1
      %p154 = por %p152, %p153
      %p156 = scmp.ne.s32.totalorder %s141, %s155
      %p157 = scmp.eq.s32.totalorder %s26, 0
      %p158 = por %p156, %p157
      %s160 = sadd.s32 %s159, 1
      %p163 = scmp.eq.s32.totalorder %s20, 1
      %p164 = scmp.ne.s32.totalorder %s159, %s161
      %p165 = scmp.eq.s32.totalorder %s20, 0
      %p166 = por %p164, %p165
      %p167 = scmp.ne.s32.totalorder %s159, %s161
      %p168 = scmp.eq.s32.totalorder %s25, 1
      %p169 = por %p167, %p168
      %p170 = scmp.ne.s32.totalorder %s161, %s162
      %p171 = scmp.eq.s32.totalorder %s25, 0
      %p172 = por %p170, %p171
      %p173 = scmp.ne.s32.totalorder %s161, %s162
      %p174 = scmp.eq.s32.totalorder %s26, 1
      %p175 = por %p173, %p174
      %p177 = scmp.ne.s32.totalorder %s162, %s176
      %p178 = scmp.eq.s32.totalorder %s26, 0
      %p179 = por %p177, %p178
      %s180 = ssub.s32 %s20, %s27
      %p181 = scmp.eq.s32.totalorder %s180, 0
      %s183 = sadd.s32 %s182, 1
      %s184 = scalar_select %p181, %s182, %s183
      %p187 = pneg %p181
      %p188 = scmp.eq.s32.totalorder %s20, 1
      %p189 = por %p187, %p188
      %p190 = scmp.ne.s32.totalorder %s182, %s185
      %p191 = scmp.eq.s32.totalorder %s20, 0
      %p192 = por %p190, %p191
      %p193 = scmp.ne.s32.totalorder %s182, %s185
      %p194 = scmp.eq.s32.totalorder %s25, 1
      %p195 = por %p193, %p194
      %p196 = scmp.ne.s32.totalorder %s185, %s186
      %p197 = scmp.eq.s32.totalorder %s25, 0
      %p198 = por %p196, %p197
      %p199 = scmp.ne.s32.totalorder %s185, %s186
      %p200 = scmp.eq.s32.totalorder %s26, 1
      %p201 = por %p199, %p200
      %p203 = scmp.ne.s32.totalorder %s186, %s202
      %p204 = scmp.eq.s32.totalorder %s26, 0
      %p205 = por %p203, %p204
      %p206 = scmp.le.s32.totalorder 1, %s20
      %p207 = scmp.lt.s32.totalorder %s20, 3
      %p208 = pnand %p206, %p207
      %p209 = pneg %p208
      // Predicated region
      $region9: #{tpu_custom_call.1} parent=5 // pred_check
        _
      $region10: #{tpu_custom_call.1} parent=5 // pred_check_branch
        %211 = sbr.rel (%p208) target = $region12
      $region11: #{tpu_custom_call.1} parent=5 // pred_region
        %s212 = ssub.s32 %s20, 1
        // Predicated region
        $region13: #{tpu_custom_call.1} parent=11 // pred_check
          %p213 = pneg %p67
        $region14: #{tpu_custom_call.1} parent=11 // pred_check_branch
          %215 = sbr.rel (%p213) target = $region16
        $region15: #{tpu_custom_call.1} parent=11 // pred_region
          %s217 = ssub.s32 2048, 2048
          %218 = vsyncadd [#allocation6], %s217
          %s219 = sshll.u32 [#allocation5], 4
          %s220 = int_to_ptr.vmem [resolvable:$true] %s219
          %225 = dma.hbm_to_vmem [thread:$0]  %s1, 2048, %s220, [#allocation6], 128, 128, 8
        $region16: #{tpu_custom_call.1} parent=11 // pred_fallthru
          _
        // Predicated region
        $region17: #{tpu_custom_call.1} parent=11 // pred_check
          %p226 = pneg %p88
        $region18: #{tpu_custom_call.1} parent=11 // pred_check_branch
          %228 = sbr.rel (%p226) target = $region20
        $region19: #{tpu_custom_call.1} parent=11 // pred_region
          _
        $region20: #{tpu_custom_call.1} parent=11 // pred_fallthru
          _
        // Predicated region
        $region21: #{tpu_custom_call.1} parent=11 // pred_check
          %p229 = pneg %p109
        $region22: #{tpu_custom_call.1} parent=11 // pred_check_branch
          %231 = sbr.rel (%p229) target = $region24
        $region23: #{tpu_custom_call.1} parent=11 // pred_region
          %s233 = ssub.s32 2048, 2048
          %234 = vsyncadd [#allocation6], %s233
          %s235 = sshll.u32 [#allocation7], 4
          %s236 = int_to_ptr.vmem [resolvable:$true] %s235
          %241 = dma.hbm_to_vmem [thread:$0]  %s3, 2048, %s236, [#allocation6], 128, 128, 8
        $region24: #{tpu_custom_call.1} parent=11 // pred_fallthru
          _
        // Predicated region
        $region25: #{tpu_custom_call.1} parent=11 // pred_check
          %p242 = pneg %p130
        $region26: #{tpu_custom_call.1} parent=11 // pred_check_branch
          %244 = sbr.rel (%p242) target = $region28
        $region27: #{tpu_custom_call.1} parent=11 // pred_region
          _
        $region28: #{tpu_custom_call.1} parent=11 // pred_fallthru
          _
        // Predicated region
        $region29: #{tpu_custom_call.1} parent=11 // pred_check
          %p245 = pneg %p151
        $region30: #{tpu_custom_call.1} parent=11 // pred_check_branch
          %247 = sbr.rel (%p245) target = $region32
        $region31: #{tpu_custom_call.1} parent=11 // pred_region
          _
        $region32: #{tpu_custom_call.1} parent=11 // pred_fallthru
          _
        // Predicated region
        $region33: #{tpu_custom_call.1} parent=11 // pred_check
          %p248 = pneg %p172
        $region34: #{tpu_custom_call.1} parent=11 // pred_check_branch
          %250 = sbr.rel (%p248) target = $region36
        $region35: #{tpu_custom_call.1} parent=11 // pred_region
          _
        $region36: #{tpu_custom_call.1} parent=11 // pred_fallthru
          _
      $region12: #{tpu_custom_call.1} parent=5 // pred_fallthru
        _
      %p251 = scmp.lt.s32.totalorder %s20, 2
      // Predicated region
      $region37: #{tpu_custom_call.1} parent=5 // pred_check
        %p252 = pneg %p251
      $region38: #{tpu_custom_call.1} parent=5 // pred_check_branch
        %254 = sbr.rel (%p252) target = $region40
      $region39: #{tpu_custom_call.1} parent=5 // pred_region
        // Predicated region
        $region41: #{tpu_custom_call.1} parent=39 // pred_check
          %p255 = pneg %p40
        $region42: #{tpu_custom_call.1} parent=39 // pred_check_branch
          %257 = sbr.rel (%p255) target = $region44
        $region43: #{tpu_custom_call.1} parent=39 // pred_region
          %s258 = sand.u32 %s30, 1
          %s259 = scalar_lea.sflag [#allocation3], %s258
          %s260 = sand.u32 %s30, 1
          %s261 = smul.addr %s260, 256
          %s262 = scalar_lea.vmem [#allocation2], %s261
          %s263 = smul.u32 32, %s20
          %s265 = ssub.s32 4096, 4096
          %266 = vsyncadd %s259, %s265
          %s267 = smul.addr %s263, 128
          %s268 = scalar_lea.hbm %s0, %s267
          %s269 = sshll.u32 %s262, 4
          %s270 = int_to_ptr.vmem [resolvable:$true] %s269
          %275 = dma.hbm_to_vmem [thread:$0]  %s268, 4096, %s270, %s259, 128, 128, 8
        $region44: #{tpu_custom_call.1} parent=39 // pred_fallthru
          _
      $region40: #{tpu_custom_call.1} parent=5 // pred_fallthru
        _
      %p276 = scmp.le.s32.totalorder 1, %s20
      %p277 = scmp.lt.s32.totalorder %s20, 3
      %p278 = pnand %p276, %p277
      %p279 = pneg %p278
      // Predicated region
      $region45: #{tpu_custom_call.1} parent=5 // pred_check
        _
      $region46: #{tpu_custom_call.1} parent=5 // pred_check_branch
        %281 = sbr.rel (%p278) target = $region48
      $region47: #{tpu_custom_call.1} parent=5 // pred_region
        %s282 = ssub.s32 %s20, 1
        %s283 = sand.u32 %s33, 1
        %s284 = scalar_lea.sflag [#allocation3], %s283
        %s285 = sand.u32 %s33, 1
        %s286 = smul.addr %s285, 256
        %s287 = scalar_lea.vmem [#allocation2], %s286
        // Predicated region
        $region49: #{tpu_custom_call.1} parent=47 // pred_check
          %p288 = pneg %p46
        $region50: #{tpu_custom_call.1} parent=47 // pred_check_branch
          %290 = sbr.rel (%p288) target = $region52
        $region51: #{tpu_custom_call.1} parent=47 // pred_region
          %291 = dma.done %s284, 4096
        $region52: #{tpu_custom_call.1} parent=47 // pred_fallthru
          _
        // Predicated region
        $region53: #{tpu_custom_call.1} parent=47 // pred_check
          %p292 = pneg %p67
        $region54: #{tpu_custom_call.1} parent=47 // pred_check_branch
          %294 = sbr.rel (%p292) target = $region56
        $region55: #{tpu_custom_call.1} parent=47 // pred_region
          %295 = dma.done [#allocation6], 2048
        $region56: #{tpu_custom_call.1} parent=47 // pred_fallthru
          _
        // Predicated region
        $region57: #{tpu_custom_call.1} parent=47 // pred_check
          %p296 = pneg %p109
        $region58: #{tpu_custom_call.1} parent=47 // pred_check_branch
          %298 = sbr.rel (%p296) target = $region60
        $region59: #{tpu_custom_call.1} parent=47 // pred_region
          %299 = dma.done [#allocation6], 2048
        $region60: #{tpu_custom_call.1} parent=47 // pred_fallthru
          _
        %s300 = sand.u32 %s33, 1
        %s301 = scalar_lea.sflag [#allocation3], %s300
        %s302 = sand.u32 %s33, 1
        %s303 = smul.addr %s302, 256
        %s304 = scalar_lea.vmem [#allocation2], %s303
        %p305 = pneg %p46
        %p306 = pneg %p43
        %p307 = pneg %p67
        %p308 = pneg %p64
        %p309 = pneg %p88
        %p310 = pneg %p85
        %p311 = pneg %p109
        %p312 = pneg %p106
        %p313 = pneg %p130
        %p314 = pneg %p127
        %p315 = pneg %p151
        %p316 = pneg %p148
        %p317 = pneg %p172
        %p318 = pneg %p169
        %p319 = pneg %p198
        %p320 = pneg %p195
        %s321 = sand.u32 %s185, 1
        %s322 = scalar_lea.sflag [#allocation4], %s321
        %s323 = sand.u32 %s185, 1
        %s324 = smul.addr %s323, 256
        %s325 = scalar_lea.vmem [#allocation8], %s324
        %s326 = smul.u32 32, %s25
        %s327 = smul.u32 32, %s25
        %v328 = vld [vmem:[%s287] sm:$0xff]
        %v329 = vld [vmem:[%s287 + $0x8] sm:$0xff]
        %v330 = vld [vmem:[%s287 + $0x10] sm:$0xff]
        %v331 = vld [vmem:[%s287 + $0x18] sm:$0xff]
        %v332 = vld [vmem:[%s287 + $0x20] sm:$0xff]
        %v333 = vld [vmem:[%s287 + $0x28] sm:$0xff]
        %v334 = vld [vmem:[%s287 + $0x30] sm:$0xff]
        %v335 = vld [vmem:[%s287 + $0x38] sm:$0xff]
        %v336 = vld [vmem:[%s287 + $0x40] sm:$0xff]
        %v337 = vld [vmem:[%s287 + $0x48] sm:$0xff]
        %v338 = vld [vmem:[%s287 + $0x50] sm:$0xff]
        %v339 = vld [vmem:[%s287 + $0x58] sm:$0xff]
        %v340 = vld [vmem:[%s287 + $0x60] sm:$0xff]
        %v341 = vld [vmem:[%s287 + $0x68] sm:$0xff]
        %v342 = vld [vmem:[%s287 + $0x70] sm:$0xff]
        %v343 = vld [vmem:[%s287 + $0x78] sm:$0xff]
        %v344 = vld [vmem:[%s287 + $0x80] sm:$0xff]
        %v345 = vld [vmem:[%s287 + $0x88] sm:$0xff]
        %v346 = vld [vmem:[%s287 + $0x90] sm:$0xff]
        %v347 = vld [vmem:[%s287 + $0x98] sm:$0xff]
        %v348 = vld [vmem:[%s287 + $0xa0] sm:$0xff]
        %v349 = vld [vmem:[%s287 + $0xa8] sm:$0xff]
        %v350 = vld [vmem:[%s287 + $0xb0] sm:$0xff]
        %v351 = vld [vmem:[%s287 + $0xb8] sm:$0xff]
        %v352 = vld [vmem:[%s287 + $0xc0] sm:$0xff]
        %v353 = vld [vmem:[%s287 + $0xc8] sm:$0xff]
        %v354 = vld [vmem:[%s287 + $0xd0] sm:$0xff]
        %v355 = vld [vmem:[%s287 + $0xd8] sm:$0xff]
        %v356 = vld [vmem:[%s287 + $0xe0] sm:$0xff]
        %v357 = vld [vmem:[%s287 + $0xe8] sm:$0xff]
        %v358 = vld [vmem:[%s287 + $0xf0] sm:$0xff]
        %v359 = vld [vmem:[%s287 + $0xf8] sm:$0xff]
        %v360 = vld [vmem:[%s4] sm:$0x1]
        %v362 = vlaneseq
        %v363 = vshrl.u32 %v362, 7
        %v364 = vsub.s32 0, %v363
        %v365 = vrot.slane %v360, %v364
        %v367 = vadd.f32 %v328, %v365
        %v368 = vadd.f32 %v329, %v365
        %v369 = vadd.f32 %v330, %v365
        %v370 = vadd.f32 %v331, %v365
        %v371 = vadd.f32 %v332, %v365
        %v372 = vadd.f32 %v333, %v365
        %v373 = vadd.f32 %v334, %v365
        %v374 = vadd.f32 %v335, %v365
        %v375 = vadd.f32 %v336, %v365
        %v376 = vadd.f32 %v337, %v365
        %v377 = vadd.f32 %v338, %v365
        %v378 = vadd.f32 %v339, %v365
        %v379 = vadd.f32 %v340, %v365
        %v380 = vadd.f32 %v341, %v365
        %v381 = vadd.f32 %v342, %v365
        %v382 = vadd.f32 %v343, %v365
        %v383 = vadd.f32 %v344, %v365
        %v384 = vadd.f32 %v345, %v365
        %v385 = vadd.f32 %v346, %v365
        %v386 = vadd.f32 %v347, %v365
        %v387 = vadd.f32 %v348, %v365
        %v388 = vadd.f32 %v349, %v365
        %v389 = vadd.f32 %v350, %v365
        %v390 = vadd.f32 %v351, %v365
        %v391 = vadd.f32 %v352, %v365
        %v392 = vadd.f32 %v353, %v365
        %v393 = vadd.f32 %v354, %v365
        %v394 = vadd.f32 %v355, %v365
        %v395 = vadd.f32 %v356, %v365
        %v396 = vadd.f32 %v357, %v365
        %v397 = vadd.f32 %v358, %v365
        %v398 = vadd.f32 %v359, %v365
        %v399 = vld [vmem:[#allocation5] sm:$0xff]
        %v400 = vld [vmem:[#allocation5 + $0x8] sm:$0xff]
        %v401 = vld [vmem:[#allocation5 + $0x10] sm:$0xff]
        %v402 = vld [vmem:[#allocation5 + $0x18] sm:$0xff]
        %v403 = vld [vmem:[#allocation5 + $0x20] sm:$0xff]
        %v404 = vld [vmem:[#allocation5 + $0x28] sm:$0xff]
        %v405 = vld [vmem:[#allocation5 + $0x30] sm:$0xff]
        %v406 = vld [vmem:[#allocation5 + $0x38] sm:$0xff]
        %v407 = vld [vmem:[#allocation5 + $0x40] sm:$0xff]
        %v408 = vld [vmem:[#allocation5 + $0x48] sm:$0xff]
        %v409 = vld [vmem:[#allocation5 + $0x50] sm:$0xff]
        %v410 = vld [vmem:[#allocation5 + $0x58] sm:$0xff]
        %v411 = vld [vmem:[#allocation5 + $0x60] sm:$0xff]
        %v412 = vld [vmem:[#allocation5 + $0x68] sm:$0xff]
        %v413 = vld [vmem:[#allocation5 + $0x70] sm:$0xff]
        %v414 = vld [vmem:[#allocation5 + $0x78] sm:$0xff]
        %v415 = vld [vmem:[%s2] sm:$0x1]
        %v417 = vlaneseq
        %v418 = vshrl.u32 %v417, 7
        %v419 = vsub.s32 0, %v418
        %v420 = vrot.slane %v415, %v419
        %422 = vmatprep.subr.mxu0 0.0
        %423 = vmatpush1.msra.mxu0 %v399
        %424 = vmatprep.subr.mxu0 0.0
        %425 = vmatpush1.msra.mxu0 %v400
        %426 = vmatprep.subr.mxu0 0.0
        %427 = vmatpush1.msra.mxu0 %v401
        %428 = vmatprep.subr.mxu0 0.0
        %429 = vmatpush1.msra.mxu0 %v402
        %430 = vmatprep.subr.mxu0 0.0
        %431 = vmatpush1.msra.mxu0 %v403
        %432 = vmatprep.subr.mxu0 0.0
        %433 = vmatpush1.msra.mxu0 %v404
        %434 = vmatprep.subr.mxu0 0.0
        %435 = vmatpush1.msra.mxu0 %v405
        %436 = vmatprep.subr.mxu0 0.0
        %437 = vmatpush1.msra.mxu0 %v406
        %438 = vmatprep.subr.mxu0 0.0
        %439 = vmatpush1.msra.mxu0 %v407
        %440 = vmatprep.subr.mxu0 0.0
        %441 = vmatpush1.msra.mxu0 %v408
        %442 = vmatprep.subr.mxu0 0.0
        %443 = vmatpush1.msra.mxu0 %v409
        %444 = vmatprep.subr.mxu0 0.0
        %445 = vmatpush1.msra.mxu0 %v410
        %446 = vmatprep.subr.mxu0 0.0
        %447 = vmatpush1.msra.mxu0 %v411
        %448 = vmatprep.subr.mxu0 0.0
        %449 = vmatpush1.msra.mxu0 %v412
        %450 = vmatprep.subr.mxu0 0.0
        %451 = vmatpush1.msra.mxu0 %v413
        %452 = vmatprep.subr.mxu0 0.0
        %453 = vmatpush1.msra.mxu0 %v414
        %454 = vmatprep.subr.mxu0 0.0
        %455 = vmatpush1.msra.mxu0 0.0
        %456 = vmatprep.subr.mxu0 0.0
        %457 = vmatpush1.msra.mxu0 0.0
        %458 = vmatprep.subr.mxu0 0.0
        %459 = vmatpush1.msra.mxu0 0.0
        %460 = vmatprep.subr.mxu0 0.0
        %461 = vmatpush1.msra.mxu0 0.0
        %462 = vmatprep.subr.mxu0 0.0
        %463 = vmatpush1.msra.mxu0 0.0
        %464 = vmatprep.subr.mxu0 0.0
        %465 = vmatpush1.msra.mxu0 0.0
        %466 = vmatprep.subr.mxu0 0.0
        %467 = vmatpush1.msra.mxu0 0.0
        %468 = vmatprep.subr.mxu0 0.0
        %469 = vmatpush1.msra.mxu0 0.0
        %470 = vmatprep.subr.mxu0 0.0
        %471 = vmatpush1.msra.mxu0 0.0
        %472 = vmatprep.subr.mxu0 0.0
        %473 = vmatpush1.msra.mxu0 0.0
        %474 = vmatprep.subr.mxu0 0.0
        %475 = vmatpush1.msra.mxu0 0.0
        %476 = vmatprep.subr.mxu0 0.0
        %477 = vmatpush1.msra.mxu0 0.0
        %478 = vmatprep.subr.mxu0 0.0
        %479 = vmatpush1.msra.mxu0 0.0
        %480 = vmatprep.subr.mxu0 0.0
        %481 = vmatpush1.msra.mxu0 0.0
        %482 = vmatprep.subr.mxu0 0.0
        %483 = vmatpush1.msra.mxu0 0.0
        %484 = vmatprep.subr.mxu0 0.0
        %485 = vmatpush1.msra.mxu0 0.0
        %486 = vmatprep.mubr.f32.mxu0 0.0
        %487 = vmatmul.mubr.f32.gmra.mrb[0].mxu0 %v328
        %v488 = vpop.f32.mrb[0].mxu0
        %v489 = vadd.f32 %v420, %v488
        %v490 = vpop.f32.mrb[0].mxu0
        %491 = vmatprep.mubr.f32.mxu0 0.0
        %492 = vmatmul.mubr.f32.gmra.mrb[0].mxu0 %v329
        %v493 = vpop.f32.mrb[0].mxu0
        %v494 = vadd.f32 %v420, %v493
        %v495 = vpop.f32.mrb[0].mxu0
        %496 = vmatprep.mubr.f32.mxu0 0.0
        %497 = vmatmul.mubr.f32.gmra.mrb[0].mxu0 %v330
        %v498 = vpop.f32.mrb[0].mxu0
        %v499 = vadd.f32 %v420, %v498
        %v500 = vpop.f32.mrb[0].mxu0
        %501 = vmatprep.mubr.f32.mxu0 0.0
        %502 = vmatmul.mubr.f32.gmra.mrb[0].mxu0 %v331
        %v503 = vpop.f32.mrb[0].mxu0
        %v504 = vadd.f32 %v420, %v503
        %v505 = vpop.f32.mrb[0].mxu0
        %506 = vmatprep.mubr.f32.mxu0 0.0
        %507 = vmatmul.mubr.f32.gmra.mrb[0].mxu0 %v332
        %v508 = vpop.f32.mrb[0].mxu0
        %v509 = vadd.f32 %v420, %v508
        %v510 = vpop.f32.mrb[0].mxu0
        %511 = vmatprep.mubr.f32.mxu0 0.0
        %512 = vmatmul.mubr.f32.gmra.mrb[0].mxu0 %v333
        %v513 = vpop.f32.mrb[0].mxu0
        %v514 = vadd.f32 %v420, %v513
        %v515 = vpop.f32.mrb[0].mxu0
        %516 = vmatprep.mubr.f32.mxu0 0.0
        %517 = vmatmul.mubr.f32.gmra.mrb[0].mxu0 %v334
        %v518 = vpop.f32.mrb[0].mxu0
        %v519 = vadd.f32 %v420, %v518
        %v520 = vpop.f32.mrb[0].mxu0
        %521 = vmatprep.mubr.f32.mxu0 0.0
        %522 = vmatmul.mubr.f32.gmra.mrb[0].mxu0 %v335
        %v523 = vpop.f32.mrb[0].mxu0
        %v524 = vadd.f32 %v420, %v523
        %v525 = vpop.f32.mrb[0].mxu0
        %526 = vmatprep.mubr.f32.mxu0 0.0
        %527 = vmatmul.mubr.f32.gmra.mrb[0].mxu0 %v336
        %v528 = vpop.f32.mrb[0].mxu0
        %v529 = vadd.f32 %v420, %v528
        %v530 = vpop.f32.mrb[0].mxu0
        %531 = vmatprep.mubr.f32.mxu0 0.0
        %532 = vmatmul.mubr.f32.gmra.mrb[0].mxu0 %v337
        %v533 = vpop.f32.mrb[0].mxu0
        %v534 = vadd.f32 %v420, %v533
        %v535 = vpop.f32.mrb[0].mxu0
        %536 = vmatprep.mubr.f32.mxu0 0.0
        %537 = vmatmul.mubr.f32.gmra.mrb[0].mxu0 %v338
        %v538 = vpop.f32.mrb[0].mxu0
        %v539 = vadd.f32 %v420, %v538
        %v540 = vpop.f32.mrb[0].mxu0
        %541 = vmatprep.mubr.f32.mxu0 0.0
        %542 = vmatmul.mubr.f32.gmra.mrb[0].mxu0 %v339
        %v543 = vpop.f32.mrb[0].mxu0
        %v544 = vadd.f32 %v420, %v543
        %v545 = vpop.f32.mrb[0].mxu0
        %546 = vmatprep.mubr.f32.mxu0 0.0
        %547 = vmatmul.mubr.f32.gmra.mrb[0].mxu0 %v340
        %v548 = vpop.f32.mrb[0].mxu0
        %v549 = vadd.f32 %v420, %v548
        %v550 = vpop.f32.mrb[0].mxu0
        %551 = vmatprep.mubr.f32.mxu0 0.0
        %552 = vmatmul.mubr.f32.gmra.mrb[0].mxu0 %v341
        %v553 = vpop.f32.mrb[0].mxu0
        %v554 = vadd.f32 %v420, %v553
        %v555 = vpop.f32.mrb[0].mxu0
        %556 = vmatprep.mubr.f32.mxu0 0.0
        %557 = vmatmul.mubr.f32.gmra.mrb[0].mxu0 %v342
        %v558 = vpop.f32.mrb[0].mxu0
        %v559 = vadd.f32 %v420, %v558
        %v560 = vpop.f32.mrb[0].mxu0
        %561 = vmatprep.mubr.f32.mxu0 0.0
        %562 = vmatmul.mubr.f32.gmra.mrb[0].mxu0 %v343
        %v563 = vpop.f32.mrb[0].mxu0
        %v564 = vadd.f32 %v420, %v563
        %v565 = vpop.f32.mrb[0].mxu0
        %566 = vmatprep.mubr.f32.mxu0 0.0
        %567 = vmatmul.mubr.f32.gmra.mrb[0].mxu0 %v344
        %v568 = vpop.f32.mrb[0].mxu0
        %v569 = vadd.f32 %v420, %v568
        %v570 = vpop.f32.mrb[0].mxu0
        %571 = vmatprep.mubr.f32.mxu0 0.0
        %572 = vmatmul.mubr.f32.gmra.mrb[0].mxu0 %v345
        %v573 = vpop.f32.mrb[0].mxu0
        %v574 = vadd.f32 %v420, %v573
        %v575 = vpop.f32.mrb[0].mxu0
        %576 = vmatprep.mubr.f32.mxu0 0.0
        %577 = vmatmul.mubr.f32.gmra.mrb[0].mxu0 %v346
        %v578 = vpop.f32.mrb[0].mxu0
        %v579 = vadd.f32 %v420, %v578
        %v580 = vpop.f32.mrb[0].mxu0
        %581 = vmatprep.mubr.f32.mxu0 0.0
        %582 = vmatmul.mubr.f32.gmra.mrb[0].mxu0 %v347
        %v583 = vpop.f32.mrb[0].mxu0
        %v584 = vadd.f32 %v420, %v583
        %v585 = vpop.f32.mrb[0].mxu0
        %586 = vmatprep.mubr.f32.mxu0 0.0
        %587 = vmatmul.mubr.f32.gmra.mrb[0].mxu0 %v348
        %v588 = vpop.f32.mrb[0].mxu0
        %v589 = vadd.f32 %v420, %v588
        %v590 = vpop.f32.mrb[0].mxu0
        %591 = vmatprep.mubr.f32.mxu0 0.0
        %592 = vmatmul.mubr.f32.gmra.mrb[0].mxu0 %v349
        %v593 = vpop.f32.mrb[0].mxu0
        %v594 = vadd.f32 %v420, %v593
        %v595 = vpop.f32.mrb[0].mxu0
        %596 = vmatprep.mubr.f32.mxu0 0.0
        %597 = vmatmul.mubr.f32.gmra.mrb[0].mxu0 %v350
        %v598 = vpop.f32.mrb[0].mxu0
        %v599 = vadd.f32 %v420, %v598
        %v600 = vpop.f32.mrb[0].mxu0
        %601 = vmatprep.mubr.f32.mxu0 0.0
        %602 = vmatmul.mubr.f32.gmra.mrb[0].mxu0 %v351
        %v603 = vpop.f32.mrb[0].mxu0
        %v604 = vadd.f32 %v420, %v603
        %v605 = vpop.f32.mrb[0].mxu0
        %606 = vmatprep.mubr.f32.mxu0 0.0
        %607 = vmatmul.mubr.f32.gmra.mrb[0].mxu0 %v352
        %v608 = vpop.f32.mrb[0].mxu0
        %v609 = vadd.f32 %v420, %v608
        %v610 = vpop.f32.mrb[0].mxu0
        %611 = vmatprep.mubr.f32.mxu0 0.0
        %612 = vmatmul.mubr.f32.gmra.mrb[0].mxu0 %v353
        %v613 = vpop.f32.mrb[0].mxu0
        %v614 = vadd.f32 %v420, %v613
        %v615 = vpop.f32.mrb[0].mxu0
        %616 = vmatprep.mubr.f32.mxu0 0.0
        %617 = vmatmul.mubr.f32.gmra.mrb[0].mxu0 %v354
        %v618 = vpop.f32.mrb[0].mxu0
        %v619 = vadd.f32 %v420, %v618
        %v620 = vpop.f32.mrb[0].mxu0
        %621 = vmatprep.mubr.f32.mxu0 0.0
        %622 = vmatmul.mubr.f32.gmra.mrb[0].mxu0 %v355
        %v623 = vpop.f32.mrb[0].mxu0
        %v624 = vadd.f32 %v420, %v623
        %v625 = vpop.f32.mrb[0].mxu0
        %626 = vmatprep.mubr.f32.mxu0 0.0
        %627 = vmatmul.mubr.f32.gmra.mrb[0].mxu0 %v356
        %v628 = vpop.f32.mrb[0].mxu0
        %v629 = vadd.f32 %v420, %v628
        %v630 = vpop.f32.mrb[0].mxu0
        %631 = vmatprep.mubr.f32.mxu0 0.0
        %632 = vmatmul.mubr.f32.gmra.mrb[0].mxu0 %v357
        %v633 = vpop.f32.mrb[0].mxu0
        %v634 = vadd.f32 %v420, %v633
        %v635 = vpop.f32.mrb[0].mxu0
        %636 = vmatprep.mubr.f32.mxu0 0.0
        %637 = vmatmul.mubr.f32.gmra.mrb[0].mxu0 %v358
        %v638 = vpop.f32.mrb[0].mxu0
        %v639 = vadd.f32 %v420, %v638
        %v640 = vpop.f32.mrb[0].mxu0
        %641 = vmatprep.mubr.f32.mxu0 0.0
        %642 = vmatmul.mubr.f32.gmra.mrb[0].mxu0 %v359
        %v643 = vpop.f32.mrb[0].mxu0
        %v644 = vadd.f32 %v420, %v643
        %v645 = vpop.f32.mrb[0].mxu0
        %646 = vdwg.mxu0
        %v647 = vmax.f32 %v489, 0.0
        %v648 = vmax.f32 %v494, 0.0
        %v649 = vmax.f32 %v499, 0.0
        %v650 = vmax.f32 %v504, 0.0
        %v651 = vmax.f32 %v509, 0.0
        %v652 = vmax.f32 %v514, 0.0
        %v653 = vmax.f32 %v519, 0.0
        %v654 = vmax.f32 %v524, 0.0
        %v655 = vmax.f32 %v529, 0.0
        %v656 = vmax.f32 %v534, 0.0
        %v657 = vmax.f32 %v539, 0.0
        %v658 = vmax.f32 %v544, 0.0
        %v659 = vmax.f32 %v549, 0.0
        %v660 = vmax.f32 %v554, 0.0
        %v661 = vmax.f32 %v559, 0.0
        %v662 = vmax.f32 %v564, 0.0
        %v663 = vmax.f32 %v569, 0.0
        %v664 = vmax.f32 %v574, 0.0
        %v665 = vmax.f32 %v579, 0.0
        %v666 = vmax.f32 %v584, 0.0
        %v667 = vmax.f32 %v589, 0.0
        %v668 = vmax.f32 %v594, 0.0
        %v669 = vmax.f32 %v599, 0.0
        %v670 = vmax.f32 %v604, 0.0
        %v671 = vmax.f32 %v609, 0.0
        %v672 = vmax.f32 %v614, 0.0
        %v673 = vmax.f32 %v619, 0.0
        %v674 = vmax.f32 %v624, 0.0
        %v675 = vmax.f32 %v629, 0.0
        %v676 = vmax.f32 %v634, 0.0
        %v677 = vmax.f32 %v639, 0.0
        %v678 = vmax.f32 %v644, 0.0
        %v679 = vld [vmem:[#allocation7] sm:$0xff]
        %v680 = vld [vmem:[#allocation7 + $0x8] sm:$0xff]
        %v681 = vld [vmem:[#allocation7 + $0x10] sm:$0xff]
        %v682 = vld [vmem:[#allocation7 + $0x18] sm:$0xff]
        %v683 = vld [vmem:[#allocation7 + $0x20] sm:$0xff]
        %v684 = vld [vmem:[#allocation7 + $0x28] sm:$0xff]
        %v685 = vld [vmem:[#allocation7 + $0x30] sm:$0xff]
        %v686 = vld [vmem:[#allocation7 + $0x38] sm:$0xff]
        %v687 = vld [vmem:[#allocation7 + $0x40] sm:$0xff]
        %v688 = vld [vmem:[#allocation7 + $0x48] sm:$0xff]
        %v689 = vld [vmem:[#allocation7 + $0x50] sm:$0xff]
        %v690 = vld [vmem:[#allocation7 + $0x58] sm:$0xff]
        %v691 = vld [vmem:[#allocation7 + $0x60] sm:$0xff]
        %v692 = vld [vmem:[#allocation7 + $0x68] sm:$0xff]
        %v693 = vld [vmem:[#allocation7 + $0x70] sm:$0xff]
        %v694 = vld [vmem:[#allocation7 + $0x78] sm:$0xff]
        %695 = vmatprep.subr.mxu0 0.0
        %696 = vmatpush1.msra.mxu0 %v679
        %697 = vmatprep.subr.mxu0 0.0
        %698 = vmatpush1.msra.mxu0 %v680
        %699 = vmatprep.subr.mxu0 0.0
        %700 = vmatpush1.msra.mxu0 %v681
        %701 = vmatprep.subr.mxu0 0.0
        %702 = vmatpush1.msra.mxu0 %v682
        %703 = vmatprep.subr.mxu0 0.0
        %704 = vmatpush1.msra.mxu0 %v683
        %705 = vmatprep.subr.mxu0 0.0
        %706 = vmatpush1.msra.mxu0 %v684
        %707 = vmatprep.subr.mxu0 0.0
        %708 = vmatpush1.msra.mxu0 %v685
        %709 = vmatprep.subr.mxu0 0.0
        %710 = vmatpush1.msra.mxu0 %v686
        %711 = vmatprep.subr.mxu0 0.0
        %712 = vmatpush1.msra.mxu0 %v687
        %713 = vmatprep.subr.mxu0 0.0
        %714 = vmatpush1.msra.mxu0 %v688
        %715 = vmatprep.subr.mxu0 0.0
        %716 = vmatpush1.msra.mxu0 %v689
        %717 = vmatprep.subr.mxu0 0.0
        %718 = vmatpush1.msra.mxu0 %v690
        %719 = vmatprep.subr.mxu0 0.0
        %720 = vmatpush1.msra.mxu0 %v691
        %721 = vmatprep.subr.mxu0 0.0
        %722 = vmatpush1.msra.mxu0 %v692
        %723 = vmatprep.subr.mxu0 0.0
        %724 = vmatpush1.msra.mxu0 %v693
        %725 = vmatprep.subr.mxu0 0.0
        %726 = vmatpush1.msra.mxu0 %v694
        %727 = vmatprep.subr.mxu0 0.0
        %728 = vmatpush1.msra.mxu0 0.0
        %729 = vmatprep.subr.mxu0 0.0
        %730 = vmatpush1.msra.mxu0 0.0
        %731 = vmatprep.subr.mxu0 0.0
        %732 = vmatpush1.msra.mxu0 0.0
        %733 = vmatprep.subr.mxu0 0.0
        %734 = vmatpush1.msra.mxu0 0.0
        %735 = vmatprep.subr.mxu0 0.0
        %736 = vmatpush1.msra.mxu0 0.0
        %737 = vmatprep.subr.mxu0 0.0
        %738 = vmatpush1.msra.mxu0 0.0
        %739 = vmatprep.subr.mxu0 0.0
        %740 = vmatpush1.msra.mxu0 0.0
        %741 = vmatprep.subr.mxu0 0.0
        %742 = vmatpush1.msra.mxu0 0.0
        %743 = vmatprep.subr.mxu0 0.0
        %744 = vmatpush1.msra.mxu0 0.0
        %745 = vmatprep.subr.mxu0 0.0
        %746 = vmatpush1.msra.mxu0 0.0
        %747 = vmatprep.subr.mxu0 0.0
        %748 = vmatpush1.msra.mxu0 0.0
        %749 = vmatprep.subr.mxu0 0.0
        %750 = vmatpush1.msra.mxu0 0.0
        %751 = vmatprep.subr.mxu0 0.0
        %752 = vmatpush1.msra.mxu0 0.0
        %753 = vmatprep.subr.mxu0 0.0
        %754 = vmatpush1.msra.mxu0 0.0
        %755 = vmatprep.subr.mxu0 0.0
        %756 = vmatpush1.msra.mxu0 0.0
        %757 = vmatprep.subr.mxu0 0.0
        %758 = vmatpush1.msra.mxu0 0.0
        %759 = vmatprep.mubr.f32.mxu0 0.0
        %760 = vmatmul.mubr.f32.gmra.mrb[0].mxu0 %v647
        %v761 = vpop.f32.mrb[0].mxu0
        %v762 = vadd.f32 0.0, %v761
        %v763 = vpop.f32.mrb[0].mxu0
        %764 = vmatprep.mubr.f32.mxu0 0.0
        %765 = vmatmul.mubr.f32.gmra.mrb[0].mxu0 %v648
        %v766 = vpop.f32.mrb[0].mxu0
        %v767 = vadd.f32 0.0, %v766
        %v768 = vpop.f32.mrb[0].mxu0
        %769 = vmatprep.mubr.f32.mxu0 0.0
        %770 = vmatmul.mubr.f32.gmra.mrb[0].mxu0 %v649
        %v771 = vpop.f32.mrb[0].mxu0
        %v772 = vadd.f32 0.0, %v771
        %v773 = vpop.f32.mrb[0].mxu0
        %774 = vmatprep.mubr.f32.mxu0 0.0
        %775 = vmatmul.mubr.f32.gmra.mrb[0].mxu0 %v650
        %v776 = vpop.f32.mrb[0].mxu0
        %v777 = vadd.f32 0.0, %v776
        %v778 = vpop.f32.mrb[0].mxu0
        %779 = vmatprep.mubr.f32.mxu0 0.0
        %780 = vmatmul.mubr.f32.gmra.mrb[0].mxu0 %v651
        %v781 = vpop.f32.mrb[0].mxu0
        %v782 = vadd.f32 0.0, %v781
        %v783 = vpop.f32.mrb[0].mxu0
        %784 = vmatprep.mubr.f32.mxu0 0.0
        %785 = vmatmul.mubr.f32.gmra.mrb[0].mxu0 %v652
        %v786 = vpop.f32.mrb[0].mxu0
        %v787 = vadd.f32 0.0, %v786
        %v788 = vpop.f32.mrb[0].mxu0
        %789 = vmatprep.mubr.f32.mxu0 0.0
        %790 = vmatmul.mubr.f32.gmra.mrb[0].mxu0 %v653
        %v791 = vpop.f32.mrb[0].mxu0
        %v792 = vadd.f32 0.0, %v791
        %v793 = vpop.f32.mrb[0].mxu0
        %794 = vmatprep.mubr.f32.mxu0 0.0
        %795 = vmatmul.mubr.f32.gmra.mrb[0].mxu0 %v654
        %v796 = vpop.f32.mrb[0].mxu0
        %v797 = vadd.f32 0.0, %v796
        %v798 = vpop.f32.mrb[0].mxu0
        %799 = vmatprep.mubr.f32.mxu0 0.0
        %800 = vmatmul.mubr.f32.gmra.mrb[0].mxu0 %v655
        %v801 = vpop.f32.mrb[0].mxu0
        %v802 = vadd.f32 0.0, %v801
        %v803 = vpop.f32.mrb[0].mxu0
        %804 = vmatprep.mubr.f32.mxu0 0.0
        %805 = vmatmul.mubr.f32.gmra.mrb[0].mxu0 %v656
        %v806 = vpop.f32.mrb[0].mxu0
        %v807 = vadd.f32 0.0, %v806
        %v808 = vpop.f32.mrb[0].mxu0
        %809 = vmatprep.mubr.f32.mxu0 0.0
        %810 = vmatmul.mubr.f32.gmra.mrb[0].mxu0 %v657
        %v811 = vpop.f32.mrb[0].mxu0
        %v812 = vadd.f32 0.0, %v811
        %v813 = vpop.f32.mrb[0].mxu0
        %814 = vmatprep.mubr.f32.mxu0 0.0
        %815 = vmatmul.mubr.f32.gmra.mrb[0].mxu0 %v658
        %v816 = vpop.f32.mrb[0].mxu0
        %v817 = vadd.f32 0.0, %v816
        %v818 = vpop.f32.mrb[0].mxu0
        %819 = vmatprep.mubr.f32.mxu0 0.0
        %820 = vmatmul.mubr.f32.gmra.mrb[0].mxu0 %v659
        %v821 = vpop.f32.mrb[0].mxu0
        %v822 = vadd.f32 0.0, %v821
        %v823 = vpop.f32.mrb[0].mxu0
        %824 = vmatprep.mubr.f32.mxu0 0.0
        %825 = vmatmul.mubr.f32.gmra.mrb[0].mxu0 %v660
        %v826 = vpop.f32.mrb[0].mxu0
        %v827 = vadd.f32 0.0, %v826
        %v828 = vpop.f32.mrb[0].mxu0
        %829 = vmatprep.mubr.f32.mxu0 0.0
        %830 = vmatmul.mubr.f32.gmra.mrb[0].mxu0 %v661
        %v831 = vpop.f32.mrb[0].mxu0
        %v832 = vadd.f32 0.0, %v831
        %v833 = vpop.f32.mrb[0].mxu0
        %834 = vmatprep.mubr.f32.mxu0 0.0
        %835 = vmatmul.mubr.f32.gmra.mrb[0].mxu0 %v662
        %v836 = vpop.f32.mrb[0].mxu0
        %v837 = vadd.f32 0.0, %v836
        %v838 = vpop.f32.mrb[0].mxu0
        %839 = vmatprep.mubr.f32.mxu0 0.0
        %840 = vmatmul.mubr.f32.gmra.mrb[0].mxu0 %v663
        %v841 = vpop.f32.mrb[0].mxu0
        %v842 = vadd.f32 0.0, %v841
        %v843 = vpop.f32.mrb[0].mxu0
        %844 = vmatprep.mubr.f32.mxu0 0.0
        %845 = vmatmul.mubr.f32.gmra.mrb[0].mxu0 %v664
        %v846 = vpop.f32.mrb[0].mxu0
        %v847 = vadd.f32 0.0, %v846
        %v848 = vpop.f32.mrb[0].mxu0
        %849 = vmatprep.mubr.f32.mxu0 0.0
        %850 = vmatmul.mubr.f32.gmra.mrb[0].mxu0 %v665
        %v851 = vpop.f32.mrb[0].mxu0
        %v852 = vadd.f32 0.0, %v851
        %v853 = vpop.f32.mrb[0].mxu0
        %854 = vmatprep.mubr.f32.mxu0 0.0
        %855 = vmatmul.mubr.f32.gmra.mrb[0].mxu0 %v666
        %v856 = vpop.f32.mrb[0].mxu0
        %v857 = vadd.f32 0.0, %v856
        %v858 = vpop.f32.mrb[0].mxu0
        %859 = vmatprep.mubr.f32.mxu0 0.0
        %860 = vmatmul.mubr.f32.gmra.mrb[0].mxu0 %v667
        %v861 = vpop.f32.mrb[0].mxu0
        %v862 = vadd.f32 0.0, %v861
        %v863 = vpop.f32.mrb[0].mxu0
        %864 = vmatprep.mubr.f32.mxu0 0.0
        %865 = vmatmul.mubr.f32.gmra.mrb[0].mxu0 %v668
        %v866 = vpop.f32.mrb[0].mxu0
        %v867 = vadd.f32 0.0, %v866
        %v868 = vpop.f32.mrb[0].mxu0
        %869 = vmatprep.mubr.f32.mxu0 0.0
        %870 = vmatmul.mubr.f32.gmra.mrb[0].mxu0 %v669
        %v871 = vpop.f32.mrb[0].mxu0
        %v872 = vadd.f32 0.0, %v871
        %v873 = vpop.f32.mrb[0].mxu0
        %874 = vmatprep.mubr.f32.mxu0 0.0
        %875 = vmatmul.mubr.f32.gmra.mrb[0].mxu0 %v670
        %v876 = vpop.f32.mrb[0].mxu0
        %v877 = vadd.f32 0.0, %v876
        %v878 = vpop.f32.mrb[0].mxu0
        %879 = vmatprep.mubr.f32.mxu0 0.0
        %880 = vmatmul.mubr.f32.gmra.mrb[0].mxu0 %v671
        %v881 = vpop.f32.mrb[0].mxu0
        %v882 = vadd.f32 0.0, %v881
        %v883 = vpop.f32.mrb[0].mxu0
        %884 = vmatprep.mubr.f32.mxu0 0.0
        %885 = vmatmul.mubr.f32.gmra.mrb[0].mxu0 %v672
        %v886 = vpop.f32.mrb[0].mxu0
        %v887 = vadd.f32 0.0, %v886
        %v888 = vpop.f32.mrb[0].mxu0
        %889 = vmatprep.mubr.f32.mxu0 0.0
        %890 = vmatmul.mubr.f32.gmra.mrb[0].mxu0 %v673
        %v891 = vpop.f32.mrb[0].mxu0
        %v892 = vadd.f32 0.0, %v891
        %v893 = vpop.f32.mrb[0].mxu0
        %894 = vmatprep.mubr.f32.mxu0 0.0
        %895 = vmatmul.mubr.f32.gmra.mrb[0].mxu0 %v674
        %v896 = vpop.f32.mrb[0].mxu0
        %v897 = vadd.f32 0.0, %v896
        %v898 = vpop.f32.mrb[0].mxu0
        %899 = vmatprep.mubr.f32.mxu0 0.0
        %900 = vmatmul.mubr.f32.gmra.mrb[0].mxu0 %v675
        %v901 = vpop.f32.mrb[0].mxu0
        %v902 = vadd.f32 0.0, %v901
        %v903 = vpop.f32.mrb[0].mxu0
        %904 = vmatprep.mubr.f32.mxu0 0.0
        %905 = vmatmul.mubr.f32.gmra.mrb[0].mxu0 %v676
        %v906 = vpop.f32.mrb[0].mxu0
        %v907 = vadd.f32 0.0, %v906
        %v908 = vpop.f32.mrb[0].mxu0
        %909 = vmatprep.mubr.f32.mxu0 0.0
        %910 = vmatmul.mubr.f32.gmra.mrb[0].mxu0 %v677
        %v911 = vpop.f32.mrb[0].mxu0
        %v912 = vadd.f32 0.0, %v911
        %v913 = vpop.f32.mrb[0].mxu0
        %914 = vmatprep.mubr.f32.mxu0 0.0
        %915 = vmatmul.mubr.f32.gmra.mrb[0].mxu0 %v678
        %v916 = vpop.f32.mrb[0].mxu0
        %v917 = vadd.f32 0.0, %v916
        %v918 = vpop.f32.mrb[0].mxu0
        %919 = vdwg.mxu0
        %v920 = vadd.f32 %v367, %v762
        %v921 = vadd.f32 %v368, %v767
        %v922 = vadd.f32 %v369, %v772
        %v923 = vadd.f32 %v370, %v777
        %v924 = vadd.f32 %v371, %v782
        %v925 = vadd.f32 %v372, %v787
        %v926 = vadd.f32 %v373, %v792
        %v927 = vadd.f32 %v374, %v797
        %v928 = vadd.f32 %v375, %v802
        %v929 = vadd.f32 %v376, %v807
        %v930 = vadd.f32 %v377, %v812
        %v931 = vadd.f32 %v378, %v817
        %v932 = vadd.f32 %v379, %v822
        %v933 = vadd.f32 %v380, %v827
        %v934 = vadd.f32 %v381, %v832
        %v935 = vadd.f32 %v382, %v837
        %v936 = vadd.f32 %v383, %v842
        %v937 = vadd.f32 %v384, %v847
        %v938 = vadd.f32 %v385, %v852
        %v939 = vadd.f32 %v386, %v857
        %v940 = vadd.f32 %v387, %v862
        %v941 = vadd.f32 %v388, %v867
        %v942 = vadd.f32 %v389, %v872
        %v943 = vadd.f32 %v390, %v877
        %v944 = vadd.f32 %v391, %v882
        %v945 = vadd.f32 %v392, %v887
        %v946 = vadd.f32 %v393, %v892
        %v947 = vadd.f32 %v394, %v897
        %v948 = vadd.f32 %v395, %v902
        %v949 = vadd.f32 %v396, %v907
        %v950 = vadd.f32 %v397, %v912
        %v951 = vadd.f32 %v398, %v917
        %952 = vadd.xlane.f32.xlu0 %v920
        %v953 = vpop.xlane.xlu0 %952
        %954 = vadd.xlane.f32.xlu0 %v921
        %v955 = vpop.xlane.xlu0 %954
        %956 = vadd.xlane.f32.xlu0 %v922
        %v957 = vpop.xlane.xlu0 %956
        %958 = vadd.xlane.f32.xlu0 %v923
        %v959 = vpop.xlane.xlu0 %958
        %960 = vadd.xlane.f32.xlu0 %v924
        %v961 = vpop.xlane.xlu0 %960
        %962 = vadd.xlane.f32.xlu0 %v925
        %v963 = vpop.xlane.xlu0 %962
        %964 = vadd.xlane.f32.xlu0 %v926
        %v965 = vpop.xlane.xlu0 %964
        %966 = vadd.xlane.f32.xlu0 %v927
        %v967 = vpop.xlane.xlu0 %966
        %968 = vadd.xlane.f32.xlu0 %v928
        %v969 = vpop.xlane.xlu0 %968
        %970 = vadd.xlane.f32.xlu0 %v929
        %v971 = vpop.xlane.xlu0 %970
        %972 = vadd.xlane.f32.xlu0 %v930
        %v973 = vpop.xlane.xlu0 %972
        %974 = vadd.xlane.f32.xlu0 %v931
        %v975 = vpop.xlane.xlu0 %974
        %976 = vadd.xlane.f32.xlu0 %v932
        %v977 = vpop.xlane.xlu0 %976
        %978 = vadd.xlane.f32.xlu0 %v933
        %v979 = vpop.xlane.xlu0 %978
        %980 = vadd.xlane.f32.xlu0 %v934
        %v981 = vpop.xlane.xlu0 %980
        %982 = vadd.xlane.f32.xlu0 %v935
        %v983 = vpop.xlane.xlu0 %982
        %984 = vadd.xlane.f32.xlu0 %v936
        %v985 = vpop.xlane.xlu0 %984
        %986 = vadd.xlane.f32.xlu0 %v937
        %v987 = vpop.xlane.xlu0 %986
        %988 = vadd.xlane.f32.xlu0 %v938
        %v989 = vpop.xlane.xlu0 %988
        %990 = vadd.xlane.f32.xlu0 %v939
        %v991 = vpop.xlane.xlu0 %990
        %992 = vadd.xlane.f32.xlu0 %v940
        %v993 = vpop.xlane.xlu0 %992
        %994 = vadd.xlane.f32.xlu0 %v941
        %v995 = vpop.xlane.xlu0 %994
        %996 = vadd.xlane.f32.xlu0 %v942
        %v997 = vpop.xlane.xlu0 %996
        %998 = vadd.xlane.f32.xlu0 %v943
        %v999 = vpop.xlane.xlu0 %998
        %1000 = vadd.xlane.f32.xlu0 %v944
        %v1001 = vpop.xlane.xlu0 %1000
        %1002 = vadd.xlane.f32.xlu0 %v945
        %v1003 = vpop.xlane.xlu0 %1002
        %1004 = vadd.xlane.f32.xlu0 %v946
        %v1005 = vpop.xlane.xlu0 %1004
        %1006 = vadd.xlane.f32.xlu0 %v947
        %v1007 = vpop.xlane.xlu0 %1006
        %1008 = vadd.xlane.f32.xlu0 %v948
        %v1009 = vpop.xlane.xlu0 %1008
        %1010 = vadd.xlane.f32.xlu0 %v949
        %v1011 = vpop.xlane.xlu0 %1010
        %1012 = vadd.xlane.f32.xlu0 %v950
        %v1013 = vpop.xlane.xlu0 %1012
        %1014 = vadd.xlane.f32.xlu0 %v951
        %v1015 = vpop.xlane.xlu0 %1014
        %v1016 = vmul.f32 %v953, 0.03125
        %v1017 = vmul.f32 %v955, 0.03125
        %v1018 = vmul.f32 %v957, 0.03125
        %v1019 = vmul.f32 %v959, 0.03125
        %v1020 = vmul.f32 %v961, 0.03125
        %v1021 = vmul.f32 %v963, 0.03125
        %v1022 = vmul.f32 %v965, 0.03125
        %v1023 = vmul.f32 %v967, 0.03125
        %v1024 = vmul.f32 %v969, 0.03125
        %v1025 = vmul.f32 %v971, 0.03125
        %v1026 = vmul.f32 %v973, 0.03125
        %v1027 = vmul.f32 %v975, 0.03125
        %v1028 = vmul.f32 %v977, 0.03125
        %v1029 = vmul.f32 %v979, 0.03125
        %v1030 = vmul.f32 %v981, 0.03125
        %v1031 = vmul.f32 %v983, 0.03125
        %v1032 = vmul.f32 %v985, 0.03125
        %v1033 = vmul.f32 %v987, 0.03125
        %v1034 = vmul.f32 %v989, 0.03125
        %v1035 = vmul.f32 %v991, 0.03125
        %v1036 = vmul.f32 %v993, 0.03125
        %v1037 = vmul.f32 %v995, 0.03125
        %v1038 = vmul.f32 %v997, 0.03125
        %v1039 = vmul.f32 %v999, 0.03125
        %v1040 = vmul.f32 %v1001, 0.03125
        %v1041 = vmul.f32 %v1003, 0.03125
        %v1042 = vmul.f32 %v1005, 0.03125
        %v1043 = vmul.f32 %v1007, 0.03125
        %v1044 = vmul.f32 %v1009, 0.03125
        %v1045 = vmul.f32 %v1011, 0.03125
        %v1046 = vmul.f32 %v1013, 0.03125
        %v1047 = vmul.f32 %v1015, 0.03125
        %v1048 = vmul.f32 %v920, %v920
        %v1049 = vmul.f32 %v921, %v921
        %v1050 = vmul.f32 %v922, %v922
        %v1051 = vmul.f32 %v923, %v923
        %v1052 = vmul.f32 %v924, %v924
        %v1053 = vmul.f32 %v925, %v925
        %v1054 = vmul.f32 %v926, %v926
        %v1055 = vmul.f32 %v927, %v927
        %v1056 = vmul.f32 %v928, %v928
        %v1057 = vmul.f32 %v929, %v929
        %v1058 = vmul.f32 %v930, %v930
        %v1059 = vmul.f32 %v931, %v931
        %v1060 = vmul.f32 %v932, %v932
        %v1061 = vmul.f32 %v933, %v933
        %v1062 = vmul.f32 %v934, %v934
        %v1063 = vmul.f32 %v935, %v935
        %v1064 = vmul.f32 %v936, %v936
        %v1065 = vmul.f32 %v937, %v937
        %v1066 = vmul.f32 %v938, %v938
        %v1067 = vmul.f32 %v939, %v939
        %v1068 = vmul.f32 %v940, %v940
        %v1069 = vmul.f32 %v941, %v941
        %v1070 = vmul.f32 %v942, %v942
        %v1071 = vmul.f32 %v943, %v943
        %v1072 = vmul.f32 %v944, %v944
        %v1073 = vmul.f32 %v945, %v945
        %v1074 = vmul.f32 %v946, %v946
        %v1075 = vmul.f32 %v947, %v947
        %v1076 = vmul.f32 %v948, %v948
        %v1077 = vmul.f32 %v949, %v949
        %v1078 = vmul.f32 %v950, %v950
        %v1079 = vmul.f32 %v951, %v951
        %1080 = vadd.xlane.f32.xlu0 %v1048
        %v1081 = vpop.xlane.xlu0 %1080
        %1082 = vadd.xlane.f32.xlu0 %v1049
        %v1083 = vpop.xlane.xlu0 %1082
        %1084 = vadd.xlane.f32.xlu0 %v1050
        %v1085 = vpop.xlane.xlu0 %1084
        %1086 = vadd.xlane.f32.xlu0 %v1051
        %v1087 = vpop.xlane.xlu0 %1086
        %1088 = vadd.xlane.f32.xlu0 %v1052
        %v1089 = vpop.xlane.xlu0 %1088
        %1090 = vadd.xlane.f32.xlu0 %v1053
        %v1091 = vpop.xlane.xlu0 %1090
        %1092 = vadd.xlane.f32.xlu0 %v1054
        %v1093 = vpop.xlane.xlu0 %1092
        %1094 = vadd.xlane.f32.xlu0 %v1055
        %v1095 = vpop.xlane.xlu0 %1094
        %1096 = vadd.xlane.f32.xlu0 %v1056
        %v1097 = vpop.xlane.xlu0 %1096
        %1098 = vadd.xlane.f32.xlu0 %v1057
        %v1099 = vpop.xlane.xlu0 %1098
        %1100 = vadd.xlane.f32.xlu0 %v1058
        %v1101 = vpop.xlane.xlu0 %1100
        %1102 = vadd.xlane.f32.xlu0 %v1059
        %v1103 = vpop.xlane.xlu0 %1102
        %1104 = vadd.xlane.f32.xlu0 %v1060
        %v1105 = vpop.xlane.xlu0 %1104
        %1106 = vadd.xlane.f32.xlu0 %v1061
        %v1107 = vpop.xlane.xlu0 %1106
        %1108 = vadd.xlane.f32.xlu0 %v1062
        %v1109 = vpop.xlane.xlu0 %1108
        %1110 = vadd.xlane.f32.xlu0 %v1063
        %v1111 = vpop.xlane.xlu0 %1110
        %1112 = vadd.xlane.f32.xlu0 %v1064
        %v1113 = vpop.xlane.xlu0 %1112
        %1114 = vadd.xlane.f32.xlu0 %v1065
        %v1115 = vpop.xlane.xlu0 %1114
        %1116 = vadd.xlane.f32.xlu0 %v1066
        %v1117 = vpop.xlane.xlu0 %1116
        %1118 = vadd.xlane.f32.xlu0 %v1067
        %v1119 = vpop.xlane.xlu0 %1118
        %1120 = vadd.xlane.f32.xlu0 %v1068
        %v1121 = vpop.xlane.xlu0 %1120
        %1122 = vadd.xlane.f32.xlu0 %v1069
        %v1123 = vpop.xlane.xlu0 %1122
        %1124 = vadd.xlane.f32.xlu0 %v1070
        %v1125 = vpop.xlane.xlu0 %1124
        %1126 = vadd.xlane.f32.xlu0 %v1071
        %v1127 = vpop.xlane.xlu0 %1126
        %1128 = vadd.xlane.f32.xlu0 %v1072
        %v1129 = vpop.xlane.xlu0 %1128
        %1130 = vadd.xlane.f32.xlu0 %v1073
        %v1131 = vpop.xlane.xlu0 %1130
        %1132 = vadd.xlane.f32.xlu0 %v1074
        %v1133 = vpop.xlane.xlu0 %1132
        %1134 = vadd.xlane.f32.xlu0 %v1075
        %v1135 = vpop.xlane.xlu0 %1134
        %1136 = vadd.xlane.f32.xlu0 %v1076
        %v1137 = vpop.xlane.xlu0 %1136
        %1138 = vadd.xlane.f32.xlu0 %v1077
        %v1139 = vpop.xlane.xlu0 %1138
        %1140 = vadd.xlane.f32.xlu0 %v1078
        %v1141 = vpop.xlane.xlu0 %1140
        %1142 = vadd.xlane.f32.xlu0 %v1079
        %v1143 = vpop.xlane.xlu0 %1142
        %v1144 = vmul.f32 %v1081, 0.03125
        %v1145 = vmul.f32 %v1083, 0.03125
        %v1146 = vmul.f32 %v1085, 0.03125
        %v1147 = vmul.f32 %v1087, 0.03125
        %v1148 = vmul.f32 %v1089, 0.03125
        %v1149 = vmul.f32 %v1091, 0.03125
        %v1150 = vmul.f32 %v1093, 0.03125
        %v1151 = vmul.f32 %v1095, 0.03125
        %v1152 = vmul.f32 %v1097, 0.03125
        %v1153 = vmul.f32 %v1099, 0.03125
        %v1154 = vmul.f32 %v1101, 0.03125
        %v1155 = vmul.f32 %v1103, 0.03125
        %v1156 = vmul.f32 %v1105, 0.03125
        %v1157 = vmul.f32 %v1107, 0.03125
        %v1158 = vmul.f32 %v1109, 0.03125
        %v1159 = vmul.f32 %v1111, 0.03125
        %v1160 = vmul.f32 %v1113, 0.03125
        %v1161 = vmul.f32 %v1115, 0.03125
        %v1162 = vmul.f32 %v1117, 0.03125
        %v1163 = vmul.f32 %v1119, 0.03125
        %v1164 = vmul.f32 %v1121, 0.03125
        %v1165 = vmul.f32 %v1123, 0.03125
        %v1166 = vmul.f32 %v1125, 0.03125
        %v1167 = vmul.f32 %v1127, 0.03125
        %v1168 = vmul.f32 %v1129, 0.03125
        %v1169 = vmul.f32 %v1131, 0.03125
        %v1170 = vmul.f32 %v1133, 0.03125
        %v1171 = vmul.f32 %v1135, 0.03125
        %v1172 = vmul.f32 %v1137, 0.03125
        %v1173 = vmul.f32 %v1139, 0.03125
        %v1174 = vmul.f32 %v1141, 0.03125
        %v1175 = vmul.f32 %v1143, 0.03125
        %v1176 = vmul.f32 %v1016, %v1016
        %v1177 = vmul.f32 %v1017, %v1017
        %v1178 = vmul.f32 %v1018, %v1018
        %v1179 = vmul.f32 %v1019, %v1019
        %v1180 = vmul.f32 %v1020, %v1020
        %v1181 = vmul.f32 %v1021, %v1021
        %v1182 = vmul.f32 %v1022, %v1022
        %v1183 = vmul.f32 %v1023, %v1023
        %v1184 = vmul.f32 %v1024, %v1024
        %v1185 = vmul.f32 %v1025, %v1025
        %v1186 = vmul.f32 %v1026, %v1026
        %v1187 = vmul.f32 %v1027, %v1027
        %v1188 = vmul.f32 %v1028, %v1028
        %v1189 = vmul.f32 %v1029, %v1029
        %v1190 = vmul.f32 %v1030, %v1030
        %v1191 = vmul.f32 %v1031, %v1031
        %v1192 = vmul.f32 %v1032, %v1032
        %v1193 = vmul.f32 %v1033, %v1033
        %v1194 = vmul.f32 %v1034, %v1034
        %v1195 = vmul.f32 %v1035, %v1035
        %v1196 = vmul.f32 %v1036, %v1036
        %v1197 = vmul.f32 %v1037, %v1037
        %v1198 = vmul.f32 %v1038, %v1038
        %v1199 = vmul.f32 %v1039, %v1039
        %v1200 = vmul.f32 %v1040, %v1040
        %v1201 = vmul.f32 %v1041, %v1041
        %v1202 = vmul.f32 %v1042, %v1042
        %v1203 = vmul.f32 %v1043, %v1043
        %v1204 = vmul.f32 %v1044, %v1044
        %v1205 = vmul.f32 %v1045, %v1045
        %v1206 = vmul.f32 %v1046, %v1046
        %v1207 = vmul.f32 %v1047, %v1047
        %v1208 = vsub.f32 %v1144, %v1176
        %v1209 = vsub.f32 %v1145, %v1177
        %v1210 = vsub.f32 %v1146, %v1178
        %v1211 = vsub.f32 %v1147, %v1179
        %v1212 = vsub.f32 %v1148, %v1180
        %v1213 = vsub.f32 %v1149, %v1181
        %v1214 = vsub.f32 %v1150, %v1182
        %v1215 = vsub.f32 %v1151, %v1183
        %v1216 = vsub.f32 %v1152, %v1184
        %v1217 = vsub.f32 %v1153, %v1185
        %v1218 = vsub.f32 %v1154, %v1186
        %v1219 = vsub.f32 %v1155, %v1187
        %v1220 = vsub.f32 %v1156, %v1188
        %v1221 = vsub.f32 %v1157, %v1189
        %v1222 = vsub.f32 %v1158, %v1190
        %v1223 = vsub.f32 %v1159, %v1191
        %v1224 = vsub.f32 %v1160, %v1192
        %v1225 = vsub.f32 %v1161, %v1193
        %v1226 = vsub.f32 %v1162, %v1194
        %v1227 = vsub.f32 %v1163, %v1195
        %v1228 = vsub.f32 %v1164, %v1196
        %v1229 = vsub.f32 %v1165, %v1197
        %v1230 = vsub.f32 %v1166, %v1198
        %v1231 = vsub.f32 %v1167, %v1199
        %v1232 = vsub.f32 %v1168, %v1200
        %v1233 = vsub.f32 %v1169, %v1201
        %v1234 = vsub.f32 %v1170, %v1202
        %v1235 = vsub.f32 %v1171, %v1203
        %v1236 = vsub.f32 %v1172, %v1204
        %v1237 = vsub.f32 %v1173, %v1205
        %v1238 = vsub.f32 %v1174, %v1206
        %v1239 = vsub.f32 %v1175, %v1207
        %v1240 = vmax.f32 %v1208, 0.0
        %v1241 = vmax.f32 %v1209, 0.0
        %v1242 = vmax.f32 %v1210, 0.0
        %v1243 = vmax.f32 %v1211, 0.0
        %v1244 = vmax.f32 %v1212, 0.0
        %v1245 = vmax.f32 %v1213, 0.0
        %v1246 = vmax.f32 %v1214, 0.0
        %v1247 = vmax.f32 %v1215, 0.0
        %v1248 = vmax.f32 %v1216, 0.0
        %v1249 = vmax.f32 %v1217, 0.0
        %v1250 = vmax.f32 %v1218, 0.0
        %v1251 = vmax.f32 %v1219, 0.0
        %v1252 = vmax.f32 %v1220, 0.0
        %v1253 = vmax.f32 %v1221, 0.0
        %v1254 = vmax.f32 %v1222, 0.0
        %v1255 = vmax.f32 %v1223, 0.0
        %v1256 = vmax.f32 %v1224, 0.0
        %v1257 = vmax.f32 %v1225, 0.0
        %v1258 = vmax.f32 %v1226, 0.0
        %v1259 = vmax.f32 %v1227, 0.0
        %v1260 = vmax.f32 %v1228, 0.0
        %v1261 = vmax.f32 %v1229, 0.0
        %v1262 = vmax.f32 %v1230, 0.0
        %v1263 = vmax.f32 %v1231, 0.0
        %v1264 = vmax.f32 %v1232, 0.0
        %v1265 = vmax.f32 %v1233, 0.0
        %v1266 = vmax.f32 %v1234, 0.0
        %v1267 = vmax.f32 %v1235, 0.0
        %v1268 = vmax.f32 %v1236, 0.0
        %v1269 = vmax.f32 %v1237, 0.0
        %v1270 = vmax.f32 %v1238, 0.0
        %v1271 = vmax.f32 %v1239, 0.0
        %v1272 = vsub.f32 %v920, %v1016
        %v1273 = vsub.f32 %v921, %v1017
        %v1274 = vsub.f32 %v922, %v1018
        %v1275 = vsub.f32 %v923, %v1019
        %v1276 = vsub.f32 %v924, %v1020
        %v1277 = vsub.f32 %v925, %v1021
        %v1278 = vsub.f32 %v926, %v1022
        %v1279 = vsub.f32 %v927, %v1023
        %v1280 = vsub.f32 %v928, %v1024
        %v1281 = vsub.f32 %v929, %v1025
        %v1282 = vsub.f32 %v930, %v1026
        %v1283 = vsub.f32 %v931, %v1027
        %v1284 = vsub.f32 %v932, %v1028
        %v1285 = vsub.f32 %v933, %v1029
        %v1286 = vsub.f32 %v934, %v1030
        %v1287 = vsub.f32 %v935, %v1031
        %v1288 = vsub.f32 %v936, %v1032
        %v1289 = vsub.f32 %v937, %v1033
        %v1290 = vsub.f32 %v938, %v1034
        %v1291 = vsub.f32 %v939, %v1035
        %v1292 = vsub.f32 %v940, %v1036
        %v1293 = vsub.f32 %v941, %v1037
        %v1294 = vsub.f32 %v942, %v1038
        %v1295 = vsub.f32 %v943, %v1039
        %v1296 = vsub.f32 %v944, %v1040
        %v1297 = vsub.f32 %v945, %v1041
        %v1298 = vsub.f32 %v946, %v1042
        %v1299 = vsub.f32 %v947, %v1043
        %v1300 = vsub.f32 %v948, %v1044
        %v1301 = vsub.f32 %v949, %v1045
        %v1302 = vsub.f32 %v950, %v1046
        %v1303 = vsub.f32 %v951, %v1047
        %v1304 = vadd.f32 %v1240, 1e-05
        %v1305 = vadd.f32 %v1241, 1e-05
        %v1306 = vadd.f32 %v1242, 1e-05
        %v1307 = vadd.f32 %v1243, 1e-05
        %v1308 = vadd.f32 %v1244, 1e-05
        %v1309 = vadd.f32 %v1245, 1e-05
        %v1310 = vadd.f32 %v1246, 1e-05
        %v1311 = vadd.f32 %v1247, 1e-05
        %v1312 = vadd.f32 %v1248, 1e-05
        %v1313 = vadd.f32 %v1249, 1e-05
        %v1314 = vadd.f32 %v1250, 1e-05
        %v1315 = vadd.f32 %v1251, 1e-05
        %v1316 = vadd.f32 %v1252, 1e-05
        %v1317 = vadd.f32 %v1253, 1e-05
        %v1318 = vadd.f32 %v1254, 1e-05
        %v1319 = vadd.f32 %v1255, 1e-05
        %v1320 = vadd.f32 %v1256, 1e-05
        %v1321 = vadd.f32 %v1257, 1e-05
        %v1322 = vadd.f32 %v1258, 1e-05
        %v1323 = vadd.f32 %v1259, 1e-05
        %v1324 = vadd.f32 %v1260, 1e-05
        %v1325 = vadd.f32 %v1261, 1e-05
        %v1326 = vadd.f32 %v1262, 1e-05
        %v1327 = vadd.f32 %v1263, 1e-05
        %v1328 = vadd.f32 %v1264, 1e-05
        %v1329 = vadd.f32 %v1265, 1e-05
        %v1330 = vadd.f32 %v1266, 1e-05
        %v1331 = vadd.f32 %v1267, 1e-05
        %v1332 = vadd.f32 %v1268, 1e-05
        %v1333 = vadd.f32 %v1269, 1e-05
        %v1334 = vadd.f32 %v1270, 1e-05
        %v1335 = vadd.f32 %v1271, 1e-05
        %v1336 = vrsqrt.pop %v1304
        %v1337 = vrsqrt.pop %v1305
        %v1338 = vrsqrt.pop %v1306
        %v1339 = vrsqrt.pop %v1307
        %v1340 = vrsqrt.pop %v1308
        %v1341 = vrsqrt.pop %v1309
        %v1342 = vrsqrt.pop %v1310
        %v1343 = vrsqrt.pop %v1311
        %v1344 = vrsqrt.pop %v1312
        %v1345 = vrsqrt.pop %v1313
        %v1346 = vrsqrt.pop %v1314
        %v1347 = vrsqrt.pop %v1315
        %v1348 = vrsqrt.pop %v1316
        %v1349 = vrsqrt.pop %v1317
        %v1350 = vrsqrt.pop %v1318
        %v1351 = vrsqrt.pop %v1319
        %v1352 = vrsqrt.pop %v1320
        %v1353 = vrsqrt.pop %v1321
        %v1354 = vrsqrt.pop %v1322
        %v1355 = vrsqrt.pop %v1323
        %v1356 = vrsqrt.pop %v1324
        %v1357 = vrsqrt.pop %v1325
        %v1358 = vrsqrt.pop %v1326
        %v1359 = vrsqrt.pop %v1327
        %v1360 = vrsqrt.pop %v1328
        %v1361 = vrsqrt.pop %v1329
        %v1362 = vrsqrt.pop %v1330
        %v1363 = vrsqrt.pop %v1331
        %v1364 = vrsqrt.pop %v1332
        %v1365 = vrsqrt.pop %v1333
        %v1366 = vrsqrt.pop %v1334
        %v1367 = vrsqrt.pop %v1335
        %v1368 = vmul.f32 %v1272, %v1336
        %v1369 = vmul.f32 %v1273, %v1337
        %v1370 = vmul.f32 %v1274, %v1338
        %v1371 = vmul.f32 %v1275, %v1339
        %v1372 = vmul.f32 %v1276, %v1340
        %v1373 = vmul.f32 %v1277, %v1341
        %v1374 = vmul.f32 %v1278, %v1342
        %v1375 = vmul.f32 %v1279, %v1343
        %v1376 = vmul.f32 %v1280, %v1344
        %v1377 = vmul.f32 %v1281, %v1345
        %v1378 = vmul.f32 %v1282, %v1346
        %v1379 = vmul.f32 %v1283, %v1347
        %v1380 = vmul.f32 %v1284, %v1348
        %v1381 = vmul.f32 %v1285, %v1349
        %v1382 = vmul.f32 %v1286, %v1350
        %v1383 = vmul.f32 %v1287, %v1351
        %v1384 = vmul.f32 %v1288, %v1352
        %v1385 = vmul.f32 %v1289, %v1353
        %v1386 = vmul.f32 %v1290, %v1354
        %v1387 = vmul.f32 %v1291, %v1355
        %v1388 = vmul.f32 %v1292, %v1356
        %v1389 = vmul.f32 %v1293, %v1357
        %v1390 = vmul.f32 %v1294, %v1358
        %v1391 = vmul.f32 %v1295, %v1359
        %v1392 = vmul.f32 %v1296, %v1360
        %v1393 = vmul.f32 %v1297, %v1361
        %v1394 = vmul.f32 %v1298, %v1362
        %v1395 = vmul.f32 %v1299, %v1363
        %v1396 = vmul.f32 %v1300, %v1364
        %v1397 = vmul.f32 %v1301, %v1365
        %v1398 = vmul.f32 %v1302, %v1366
        %v1399 = vmul.f32 %v1303, %v1367
        %v1400 = vld [vmem:[%s5] sm:$0x1]
        %v1402 = vlaneseq
        %v1403 = vshrl.u32 %v1402, 7
        %v1404 = vsub.s32 0, %v1403
        %v1405 = vrot.slane %v1400, %v1404
        %v1407 = vmul.f32 %v1368, %v1405
        %v1408 = vmul.f32 %v1369, %v1405
        %v1409 = vmul.f32 %v1370, %v1405
        %v1410 = vmul.f32 %v1371, %v1405
        %v1411 = vmul.f32 %v1372, %v1405
        %v1412 = vmul.f32 %v1373, %v1405
        %v1413 = vmul.f32 %v1374, %v1405
        %v1414 = vmul.f32 %v1375, %v1405
        %v1415 = vmul.f32 %v1376, %v1405
        %v1416 = vmul.f32 %v1377, %v1405
        %v1417 = vmul.f32 %v1378, %v1405
        %v1418 = vmul.f32 %v1379, %v1405
        %v1419 = vmul.f32 %v1380, %v1405
        %v1420 = vmul.f32 %v1381, %v1405
        %v1421 = vmul.f32 %v1382, %v1405
        %v1422 = vmul.f32 %v1383, %v1405
        %v1423 = vmul.f32 %v1384, %v1405
        %v1424 = vmul.f32 %v1385, %v1405
        %v1425 = vmul.f32 %v1386, %v1405
        %v1426 = vmul.f32 %v1387, %v1405
        %v1427 = vmul.f32 %v1388, %v1405
        %v1428 = vmul.f32 %v1389, %v1405
        %v1429 = vmul.f32 %v1390, %v1405
        %v1430 = vmul.f32 %v1391, %v1405
        %v1431 = vmul.f32 %v1392, %v1405
        %v1432 = vmul.f32 %v1393, %v1405
        %v1433 = vmul.f32 %v1394, %v1405
        %v1434 = vmul.f32 %v1395, %v1405
        %v1435 = vmul.f32 %v1396, %v1405
        %v1436 = vmul.f32 %v1397, %v1405
        %v1437 = vmul.f32 %v1398, %v1405
        %v1438 = vmul.f32 %v1399, %v1405
        %v1439 = vld [vmem:[%s6] sm:$0x1]
        %v1441 = vlaneseq
        %v1442 = vshrl.u32 %v1441, 7
        %v1443 = vsub.s32 0, %v1442
        %v1444 = vrot.slane %v1439, %v1443
        %v1446 = vadd.f32 %v1407, %v1444
        %v1447 = vadd.f32 %v1408, %v1444
        %v1448 = vadd.f32 %v1409, %v1444
        %v1449 = vadd.f32 %v1410, %v1444
        %v1450 = vadd.f32 %v1411, %v1444
        %v1451 = vadd.f32 %v1412, %v1444
        %v1452 = vadd.f32 %v1413, %v1444
        %v1453 = vadd.f32 %v1414, %v1444
        %v1454 = vadd.f32 %v1415, %v1444
        %v1455 = vadd.f32 %v1416, %v1444
        %v1456 = vadd.f32 %v1417, %v1444
        %v1457 = vadd.f32 %v1418, %v1444
        %v1458 = vadd.f32 %v1419, %v1444
        %v1459 = vadd.f32 %v1420, %v1444
        %v1460 = vadd.f32 %v1421, %v1444
        %v1461 = vadd.f32 %v1422, %v1444
        %v1462 = vadd.f32 %v1423, %v1444
        %v1463 = vadd.f32 %v1424, %v1444
        %v1464 = vadd.f32 %v1425, %v1444
        %v1465 = vadd.f32 %v1426, %v1444
        %v1466 = vadd.f32 %v1427, %v1444
        %v1467 = vadd.f32 %v1428, %v1444
        %v1468 = vadd.f32 %v1429, %v1444
        %v1469 = vadd.f32 %v1430, %v1444
        %v1470 = vadd.f32 %v1431, %v1444
        %v1471 = vadd.f32 %v1432, %v1444
        %v1472 = vadd.f32 %v1433, %v1444
        %v1473 = vadd.f32 %v1434, %v1444
        %v1474 = vadd.f32 %v1435, %v1444
        %v1475 = vadd.f32 %v1436, %v1444
        %v1476 = vadd.f32 %v1437, %v1444
        %v1477 = vadd.f32 %v1438, %v1444
        %1478 = vst [vmem:[%s325] sm:$0xff] %v1446
        %1479 = vst [vmem:[%s325 + $0x8] sm:$0xff] %v1447
        %1480 = vst [vmem:[%s325 + $0x10] sm:$0xff] %v1448
        %1481 = vst [vmem:[%s325 + $0x18] sm:$0xff] %v1449
        %1482 = vst [vmem:[%s325 + $0x20] sm:$0xff] %v1450
        %1483 = vst [vmem:[%s325 + $0x28] sm:$0xff] %v1451
        %1484 = vst [vmem:[%s325 + $0x30] sm:$0xff] %v1452
        %1485 = vst [vmem:[%s325 + $0x38] sm:$0xff] %v1453
        %1486 = vst [vmem:[%s325 + $0x40] sm:$0xff] %v1454
        %1487 = vst [vmem:[%s325 + $0x48] sm:$0xff] %v1455
        %1488 = vst [vmem:[%s325 + $0x50] sm:$0xff] %v1456
        %1489 = vst [vmem:[%s325 + $0x58] sm:$0xff] %v1457
        %1490 = vst [vmem:[%s325 + $0x60] sm:$0xff] %v1458
        %1491 = vst [vmem:[%s325 + $0x68] sm:$0xff] %v1459
        %1492 = vst [vmem:[%s325 + $0x70] sm:$0xff] %v1460
        %1493 = vst [vmem:[%s325 + $0x78] sm:$0xff] %v1461
        %1494 = vst [vmem:[%s325 + $0x80] sm:$0xff] %v1462
        %1495 = vst [vmem:[%s325 + $0x88] sm:$0xff] %v1463
        %1496 = vst [vmem:[%s325 + $0x90] sm:$0xff] %v1464
        %1497 = vst [vmem:[%s325 + $0x98] sm:$0xff] %v1465
        %1498 = vst [vmem:[%s325 + $0xa0] sm:$0xff] %v1466
        %1499 = vst [vmem:[%s325 + $0xa8] sm:$0xff] %v1467
        %1500 = vst [vmem:[%s325 + $0xb0] sm:$0xff] %v1468
        %1501 = vst [vmem:[%s325 + $0xb8] sm:$0xff] %v1469
        %1502 = vst [vmem:[%s325 + $0xc0] sm:$0xff] %v1470
        %1503 = vst [vmem:[%s325 + $0xc8] sm:$0xff] %v1471
        %1504 = vst [vmem:[%s325 + $0xd0] sm:$0xff] %v1472
        %1505 = vst [vmem:[%s325 + $0xd8] sm:$0xff] %v1473
        %1506 = vst [vmem:[%s325 + $0xe0] sm:$0xff] %v1474
        %1507 = vst [vmem:[%s325 + $0xe8] sm:$0xff] %v1475
        %1508 = vst [vmem:[%s325 + $0xf0] sm:$0xff] %v1476
        %1509 = vst [vmem:[%s325 + $0xf8] sm:$0xff] %v1477
        %s1510 = sand.u32 %s185, 1
        %s1511 = scalar_lea.sflag [#allocation4], %s1510
        %s1512 = sand.u32 %s185, 1
        %s1513 = smul.addr %s1512, 256
        %s1514 = scalar_lea.vmem [#allocation8], %s1513
        // Predicated region
        $region61: #{tpu_custom_call.1} parent=47 // pred_check
          %p1515 = pneg %p195
        $region62: #{tpu_custom_call.1} parent=47 // pred_check_branch
          %1517 = sbr.rel (%p1515) target = $region64
        $region63: #{tpu_custom_call.1} parent=47 // pred_region
          %s1518 = smul.u32 32, %s25
          %s1520 = ssub.s32 4096, 4096
          %1521 = vsyncadd %s1511, %s1520
          %s1522 = smul.addr %s1518, 128
          %s1523 = scalar_lea.hbm %s7, %s1522
          %s1524 = sshll.u32 %s1514, 4
          %s1525 = int_to_ptr.vmem [resolvable:$true] %s1524
          %1530 = dma.vmem_to_hbm [thread:$0]  %s1525, 4096, %s1523, %s1511, 128, 128, 8
        $region64: #{tpu_custom_call.1} parent=47 // pred_fallthru
          _
      $region48: #{tpu_custom_call.1} parent=5 // pred_fallthru
        _
      %p1531 = scmp.le.s32.totalorder 2, %s20
      // Predicated region
      $region65: #{tpu_custom_call.1} parent=5 // pred_check
        %p1532 = pneg %p1531
      $region66: #{tpu_custom_call.1} parent=5 // pred_check_branch
        %1534 = sbr.rel (%p1532) target = $region68
      $region67: #{tpu_custom_call.1} parent=5 // pred_region
        %s1535 = ssub.s32 %s20, 2
        // Predicated region
        $region69: #{tpu_custom_call.1} parent=67 // pred_check
          %p1536 = pneg %p201
        $region70: #{tpu_custom_call.1} parent=67 // pred_check_branch
          %1538 = sbr.rel (%p1536) target = $region72
        $region71: #{tpu_custom_call.1} parent=67 // pred_region
          %s1539 = sand.u32 %s186, 1
          %s1540 = scalar_lea.sflag [#allocation4], %s1539
          %s1541 = sand.u32 %s186, 1
          %s1542 = smul.addr %s1541, 256
          %s1543 = scalar_lea.vmem [#allocation8], %s1542
          %1544 = dma.done %s1540, 4096
        $region72: #{tpu_custom_call.1} parent=67 // pred_fallthru
          _
      $region68: #{tpu_custom_call.1} parent=5 // pred_fallthru
        _
    $region6: #{tpu_custom_call.1} parent=1 // loop_footer
      %s24 = sadd.s32 1, %s20
    $region7: #{tpu_custom_call.1} parent=1 // loop_footer_branch
      %19 = sbr.rel target = $region3
    $region8: #{tpu_custom_call.1} parent=1 // loop_exit
      _
    %1545 = vsyncpa [#allocation3], 1
    %s1546 = scalar_lea.sflag [#allocation3], 1
    %1547 = vsyncpa %s1546, 1
    %1548 = vsyncpa [#allocation6], 1
    %1549 = vsyncpa [#allocation4], 1
    %s1550 = scalar_lea.sflag [#allocation4], 1
    %1551 = vsyncpa %s1550, 1

</llo_original>
